<compile_context>
chip_gen: v5e
topology: v5e:2x2
jax: 0.10.0
libtpu: 0.0.40
codegen_flags: <defaults>
</compile_context>

<pallas_src>
import math

import jax
import jax.numpy as jnp
import numpy as np
from jax.experimental import pallas as pl
from jax.experimental.pallas import tpu as pltpu

_EPS = 1e-5  # PyTorch GroupNorm default


def _make_kernel(HW, C_out, K2C, groups, act):
    inv_cnt = 1.0 / float((C_out // groups) * HW)
    hi = jax.lax.Precision.HIGHEST  # exact f32 for the tiny GroupNorm stat matmuls

    def kernel(x_ref, w_ref, gamma_ref, beta_ref, agg_ref, aggt_ref, out_ref, acc_ref):
        # x_ref   : (1, HW, K2C)   bf16 im2col LHS (lane-dense)
        # w_ref   : (K2C, C_out)   bf16 im2col RHS
        # gamma/beta : (1, C_out)  f32
        # agg_ref : (C_out, G) one-hot channel->group map, f32 (host precomputed)
        # aggt_ref: (G, C_out) its transpose (host precomputed)
        # out_ref : (1, HW, C_out) bf16
        # acc_ref : (HW, C_out)    f32 VMEM scratch (conv result, streamed 3x below)

        # ---- conv: one K=K2C MXU matmul, bf16 products / f32 accumulate ----
        acc_ref[...] = jnp.dot(x_ref[0], w_ref[...],
                               preferred_element_type=jnp.float32)

        # ---- GroupNorm, two-pass f32 statistics (PyTorch: biased var per group) ----
        # pass 1: per-channel sums -> per-group mean -> broadcast back to channels
        ssum = jnp.sum(acc_ref[...], axis=0, keepdims=True)               # (1, C)
        mean_g = jnp.dot(ssum, agg_ref[...],
                         preferred_element_type=jnp.float32,
                         precision=hi) * inv_cnt                          # (1, G)
        mean_c = jnp.dot(mean_g, aggt_ref[...],
                         preferred_element_type=jnp.float32, precision=hi)  # (1, C)

        # pass 2: centered sum of squares -> per-group variance -> rsqrt -> broadcast
        d = acc_ref[...] - mean_c
        ssq = jnp.sum(d * d, axis=0, keepdims=True)                       # (1, C)
        var_g = jnp.dot(ssq, agg_ref[...],
                        preferred_element_type=jnp.float32,
                        precision=hi) * inv_cnt                           # (1, G)
        inv_g = jax.lax.rsqrt(var_g + _EPS)                               # (1, G)  EUP
        inv_c = jnp.dot(inv_g, aggt_ref[...],
                        preferred_element_type=jnp.float32, precision=hi)  # (1, C)

        scale = inv_c * gamma_ref[...]                                    # (1, C)
        shift = beta_ref[...] - mean_c * scale                            # (1, C)

        # ---- affine (+ReLU) epilogue: 2 wide VPU ops, lane-dense bf16 store ----
        y = acc_ref[...] * scale + shift
        if act:
            y = jnp.maximum(y, 0.0)
        out_ref[0] = y.astype(out_ref.dtype)

    return kernel


def conv_gn_relu(x_nchw, weight_hwio, gamma, beta, *, ng=32, act=True,
                 out_dtype=jnp.bfloat16, channels_last=False):
    """Forward of LaneGCN `Conv` with norm='GN', stride=1, odd kernel size, no bias."""
    N, C_in, H, W = x_nchw.shape
    kh, kw, wc_in, C_out = weight_hwio.shape
    assert kh == kw and kh % 2 == 1 and wc_in == C_in
    # TODO(synk): stride > 1 and norm='BN'/'SyncBN' paths of the module are not implemented.
    ksize = kh
    pad = (ksize - 1) // 2
    groups = math.gcd(ng, C_out)   # matches LaneGCN's gcd(ng, n_out) trick
    cpg = C_out // groups
    HW = H * W
    K2C = ksize * ksize * C_in

    # ---- host-side layout prep (single fused producer: NHWC, pad, im2col, bf16) ----
    x_nhwc = jnp.transpose(x_nchw, (0, 2, 3, 1)).astype(jnp.bfloat16)
    x_pad = jnp.pad(x_nhwc, ((0, 0), (pad, pad), (pad, pad), (0, 0)))
    cols = [x_pad[:, dy:dy + H, dx:dx + W, :]
            for dy in range(ksize) for dx in range(ksize)]
    x_cols = jnp.concatenate(cols, axis=-1).reshape(N, HW, K2C)

    # weight (kh, kw, C_in, C_out) flattened in (dy, dx, c_in) order == cols order above.
    w = weight_hwio.reshape(K2C, C_out).astype(jnp.bfloat16)
    gamma2 = gamma.reshape(1, C_out).astype(jnp.float32)
    beta2 = beta.reshape(1, C_out).astype(jnp.float32)
    agg_np = (np.arange(C_out)[:, None] // cpg
              == np.arange(groups)[None, :]).astype(np.float32)
    agg = jnp.asarray(agg_np)        # (C_out, G)  channel -> group one-hot
    agg_t = jnp.asarray(agg_np.T)    # (G, C_out)  group   -> channel broadcast

    flops = 2 * N * HW * C_out * K2C + 10 * N * HW * C_out
    bytes_accessed = int(x_cols.size * 2 + w.size * 2 +
                         N * HW * C_out * np.dtype(out_dtype).itemsize +
                         (gamma2.size + beta2.size + agg.size + agg_t.size) * 4)

    out = pl.pallas_call(
        _make_kernel(HW, C_out, K2C, groups, act),
        out_shape=jax.ShapeDtypeStruct((N, HW, C_out), out_dtype),
        grid=(N,),
        in_specs=[
            pl.BlockSpec((1, HW, K2C), lambda n: (n, 0, 0)),
            pl.BlockSpec((K2C, C_out), lambda n: (0, 0)),
            pl.BlockSpec((1, C_out), lambda n: (0, 0)),
            pl.BlockSpec((1, C_out), lambda n: (0, 0)),
            pl.BlockSpec((C_out, groups), lambda n: (0, 0)),
            pl.BlockSpec((groups, C_out), lambda n: (0, 0)),
        ],
        out_specs=pl.BlockSpec((1, HW, C_out), lambda n: (n, 0, 0)),
        scratch_shapes=[pltpu.VMEM((HW, C_out), jnp.float32)],
        compiler_params=pltpu.CompilerParams(dimension_semantics=("parallel",)),
        cost_estimate=pl.CostEstimate(flops=flops, transcendentals=N * groups,
                                      bytes_accessed=bytes_accessed),
    )(x_cols, w, gamma2, beta2, agg, agg_t)

    out = out.reshape(N, H, W, C_out)
    if channels_last:
        return out                               # NHWC, no extra HBM round trip
    return jnp.transpose(out, (0, 3, 1, 2))      # NCHW (PyTorch layout)


# ----------------------------- pure-JAX reference -----------------------------
def conv_gn_relu_ref(x_nchw, weight_hwio, gamma, beta, *, ng=32, act=True,
                     out_dtype=jnp.bfloat16, channels_last=False):
    N, C_in, H, W = x_nchw.shape
    kh, kw, _, C_out = weight_hwio.shape
    pad = (kh - 1) // 2
    groups = math.gcd(ng, C_out)

    xp = jnp.pad(jnp.transpose(x_nchw, (0, 2, 3, 1)).astype(jnp.bfloat16),
                 ((0, 0), (pad, pad), (pad, pad), (0, 0)))
    wb = weight_hwio.astype(jnp.bfloat16)
    y = jnp.zeros((N, H, W, C_out), jnp.float32)
    for dy in range(kh):
        for dx in range(kw):
            y = y + jnp.einsum("nhwc,co->nhwo", xp[:, dy:dy + H, dx:dx + W, :],
                               wb[dy, dx], preferred_element_type=jnp.float32)

    # GroupNorm with PyTorch semantics: biased variance over (cpg, H, W) per sample/group.
    yg = y.reshape(N, H, W, groups, C_out // groups)
    mean = yg.mean(axis=(1, 2, 4), keepdims=True)
    var = yg.var(axis=(1, 2, 4), keepdims=True)
    yn = (yg - mean) * jax.lax.rsqrt(var + _EPS)
    yn = yn.reshape(N, H, W, C_out) * gamma.reshape(1, 1, 1, C_out) \
        + beta.reshape(1, 1, 1, C_out)
    if act:
        yn = jnp.maximum(yn, 0.0)
    yn = yn.astype(out_dtype)
    if channels_last:
        return yn
    return jnp.transpose(yn, (0, 3, 1, 2))


if __name__ == "__main__":
    # Module config: Conv(n_in=16, n_out=128, kernel_size=3, norm='GN', ng=32, act=True)
    #   -> GroupNorm groups = gcd(32, 128) = 32, channels per group = 4.
    N, C_in, H, W = 2, 16, 16, 16
    C_out, ksize, ng = 128, 3, 32

    key = jax.random.PRNGKey(0)
    k1, k2, k3, k4 = jax.random.split(key, 4)
    x = jax.random.normal(k1, (N, C_in, H, W), jnp.float32)
    weight = jax.random.normal(k2, (ksize, ksize, C_in, C_out), jnp.float32)
    weight = weight * (1.0 / math.sqrt(ksize * ksize * C_in))
    gamma = 1.0 + 0.1 * jax.random.normal(k3, (C_out,), jnp.float32)
    beta = 0.1 * jax.random.normal(k4, (C_out,), jnp.float32)

    out = jax.block_until_ready(
        conv_gn_relu(x, weight, gamma, beta, ng=ng, act=True, channels_last=True))
    ref = jax.block_until_ready(
        conv_gn_relu_ref(x, weight, gamma, beta, ng=ng, act=True, channels_last=True))

    # Both paths: bf16 conv products + f32 accumulation, exact-f32 GroupNorm statistics,
    # independent bf16 rounding only at the final store -> <= 1 bf16 ulp apart.
    np.testing.assert_allclose(np.asarray(out).astype(np.float32),
                               np.asarray(ref).astype(np.float32),
                               atol=2e-2, rtol=2e-2)
    print("KERNEL_OK")
</pallas_src>

<mosaic_0001>
module attributes {stable_mosaic.version = 11 : i64} {
  func.func @kernel(%arg0: i32, %arg1: memref<1x256x144xbf16, #tpu.memory_space<vmem>>, %arg2: memref<144x128xbf16, #tpu.memory_space<vmem>>, %arg3: memref<1x128xf32, #tpu.memory_space<vmem>>, %arg4: memref<1x128xf32, #tpu.memory_space<vmem>>, %arg5: memref<128x32xf32, #tpu.memory_space<vmem>>, %arg6: memref<32x128xf32, #tpu.memory_space<vmem>>, %arg7: memref<1x256x128xbf16, #tpu.memory_space<vmem>>, %arg8: memref<256x128xf32, #tpu.memory_space<vmem>>) attributes {dimension_semantics = [#tpu.dimension_semantics<parallel>], iteration_bounds = array<i64: 2>, scalar_prefetch = 0 : i64, scratch_operands = 1 : i64, tpu.core_type = #tpu.core_type<tc>, window_params = [{transform_indices = @transform_0, window_bounds = array<i64: 1, 256, 144>}, {pipeline_mode = #tpu.pipeline_mode<synchronous>, transform_indices = @transform_1, window_bounds = array<i64: 144, 128>}, {pipeline_mode = #tpu.pipeline_mode<synchronous>, transform_indices = @transform_2, window_bounds = array<i64: 1, 128>}, {pipeline_mode = #tpu.pipeline_mode<synchronous>, transform_indices = @transform_3, window_bounds = array<i64: 1, 128>}, {pipeline_mode = #tpu.pipeline_mode<synchronous>, transform_indices = @transform_4, window_bounds = array<i64: 128, 32>}, {pipeline_mode = #tpu.pipeline_mode<synchronous>, transform_indices = @transform_5, window_bounds = array<i64: 32, 128>}, {transform_indices = @transform_6, window_bounds = array<i64: 1, 256, 128>}]} {
    %c0 = arith.constant 0 : index
    %c0_0 = arith.constant 0 : index
    %c0_1 = arith.constant 0 : index
    %0 = vector.load %arg1[%c0, %c0_0, %c0_1] : memref<1x256x144xbf16, #tpu.memory_space<vmem>>, vector<1x256x144xbf16>
    %1 = vector.shape_cast %0 : vector<1x256x144xbf16> to vector<256x144xbf16>
    %c0_2 = arith.constant 0 : index
    %c0_3 = arith.constant 0 : index
    %2 = vector.load %arg2[%c0_2, %c0_3] : memref<144x128xbf16, #tpu.memory_space<vmem>>, vector<144x128xbf16>
    %cst = arith.constant dense<0.000000e+00> : vector<256x128xf32>
    %3 = tpu.matmul %1, %2, %cst {dimension_numbers = #tpu.dot_dimension_numbers<[1], [0], [0], [1], [0, 0, 1, 1], [], []>} : vector<256x144xbf16>, vector<144x128xbf16>, vector<256x128xf32> -> vector<256x128xf32>
    %c0_4 = arith.constant 0 : index
    %c0_5 = arith.constant 0 : index
    %4 = vector.load %arg8[%c0_4, %c0_5] : memref<256x128xf32, #tpu.memory_space<vmem>>, vector<256x128xf32>
    tpu.vector_store %arg8[%c0_4, %c0_5], %3 {strides = array<i32>} : memref<256x128xf32, #tpu.memory_space<vmem>>, vector<256x128xf32>,
    %c0_6 = arith.constant 0 : index
    %c0_7 = arith.constant 0 : index
    %5 = vector.load %arg8[%c0_6, %c0_7] : memref<256x128xf32, #tpu.memory_space<vmem>>, vector<256x128xf32>
    %cst_8 = arith.constant dense<0.000000e+00> : vector<128xf32>
    %6 = vector.multi_reduction <add>, %5, %cst_8 [0] : vector<256x128xf32> to vector<128xf32>
    %7 = vector.shape_cast %6 : vector<128xf32> to vector<1x128xf32>
    %c0_9 = arith.constant 0 : index
    %c0_10 = arith.constant 0 : index
    %8 = vector.load %arg5[%c0_9, %c0_10] : memref<128x32xf32, #tpu.memory_space<vmem>>, vector<128x32xf32>
    %cst_11 = arith.constant dense<0.000000e+00> : vector<1x32xf32>
    %9 = tpu.matmul %7, %8, %cst_11 {dimension_numbers = #tpu.dot_dimension_numbers<[1], [0], [0], [1], [0, 0, 1, 1], [], []>, precision = #tpu.contract_precision<fp32>} : vector<1x128xf32>, vector<128x32xf32>, vector<1x32xf32> -> vector<1x32xf32>
    %cst_12 = arith.constant 9.765625E-4 : f32
    %10 = vector.broadcast %cst_12 : f32 to vector<1x32xf32>
    %11 = arith.mulf %9, %10 : vector<1x32xf32>
    %c0_13 = arith.constant 0 : index
    %c0_14 = arith.constant 0 : index
    %12 = vector.load %arg6[%c0_13, %c0_14] : memref<32x128xf32, #tpu.memory_space<vmem>>, vector<32x128xf32>
    %cst_15 = arith.constant dense<0.000000e+00> : vector<1x128xf32>
    %13 = tpu.matmul %11, %12, %cst_15 {dimension_numbers = #tpu.dot_dimension_numbers<[1], [0], [0], [1], [0, 0, 1, 1], [], []>, precision = #tpu.contract_precision<fp32>} : vector<1x32xf32>, vector<32x128xf32>, vector<1x128xf32> -> vector<1x128xf32>
    %c0_16 = arith.constant 0 : index
    %c0_17 = arith.constant 0 : index
    %14 = vector.load %arg8[%c0_16, %c0_17] : memref<256x128xf32, #tpu.memory_space<vmem>>, vector<256x128xf32>
    %15 = vector.broadcast %13 : vector<1x128xf32> to vector<256x128xf32>
    %16 = arith.subf %14, %15 : vector<256x128xf32>
    %17 = arith.mulf %16, %16 : vector<256x128xf32>
    %cst_18 = arith.constant dense<0.000000e+00> : vector<128xf32>
    %18 = vector.multi_reduction <add>, %17, %cst_18 [0] : vector<256x128xf32> to vector<128xf32>
    %19 = vector.shape_cast %18 : vector<128xf32> to vector<1x128xf32>
    %c0_19 = arith.constant 0 : index
    %c0_20 = arith.constant 0 : index
    %20 = vector.load %arg5[%c0_19, %c0_20] : memref<128x32xf32, #tpu.memory_space<vmem>>, vector<128x32xf32>
    %cst_21 = arith.constant dense<0.000000e+00> : vector<1x32xf32>
    %21 = tpu.matmul %19, %20, %cst_21 {dimension_numbers = #tpu.dot_dimension_numbers<[1], [0], [0], [1], [0, 0, 1, 1], [], []>, precision = #tpu.contract_precision<fp32>} : vector<1x128xf32>, vector<128x32xf32>, vector<1x32xf32> -> vector<1x32xf32>
    %cst_22 = arith.constant 9.765625E-4 : f32
    %22 = vector.broadcast %cst_22 : f32 to vector<1x32xf32>
    %23 = arith.mulf %21, %22 : vector<1x32xf32>
    %cst_23 = arith.constant 9.99999974E-6 : f32
    %24 = vector.broadcast %cst_23 : f32 to vector<1x32xf32>
    %25 = arith.addf %23, %24 : vector<1x32xf32>
    %26 = math.rsqrt %25 : vector<1x32xf32>
    %c0_24 = arith.constant 0 : index
    %c0_25 = arith.constant 0 : index
    %27 = vector.load %arg6[%c0_24, %c0_25] : memref<32x128xf32, #tpu.memory_space<vmem>>, vector<32x128xf32>
    %cst_26 = arith.constant dense<0.000000e+00> : vector<1x128xf32>
    %28 = tpu.matmul %26, %27, %cst_26 {dimension_numbers = #tpu.dot_dimension_numbers<[1], [0], [0], [1], [0, 0, 1, 1], [], []>, precision = #tpu.contract_precision<fp32>} : vector<1x32xf32>, vector<32x128xf32>, vector<1x128xf32> -> vector<1x128xf32>
    %c0_27 = arith.constant 0 : index
    %c0_28 = arith.constant 0 : index
    %29 = vector.load %arg3[%c0_27, %c0_28] : memref<1x128xf32, #tpu.memory_space<vmem>>, vector<1x128xf32>
    %30 = arith.mulf %28, %29 : vector<1x128xf32>
    %c0_29 = arith.constant 0 : index
    %c0_30 = arith.constant 0 : index
    %31 = vector.load %arg4[%c0_29, %c0_30] : memref<1x128xf32, #tpu.memory_space<vmem>>, vector<1x128xf32>
    %32 = arith.mulf %13, %30 : vector<1x128xf32>
    %33 = arith.subf %31, %32 : vector<1x128xf32>
    %c0_31 = arith.constant 0 : index
    %c0_32 = arith.constant 0 : index
    %34 = vector.load %arg8[%c0_31, %c0_32] : memref<256x128xf32, #tpu.memory_space<vmem>>, vector<256x128xf32>
    %35 = vector.broadcast %30 : vector<1x128xf32> to vector<256x128xf32>
    %36 = arith.mulf %34, %35 : vector<256x128xf32>
    %37 = vector.broadcast %33 : vector<1x128xf32> to vector<256x128xf32>
    %38 = arith.addf %36, %37 : vector<256x128xf32>
    %cst_33 = arith.constant 0.000000e+00 : f32
    %39 = vector.broadcast %cst_33 : f32 to vector<256x128xf32>
    %40 = arith.maximumf %38, %39 : vector<256x128xf32>
    %41 = arith.truncf %40 : vector<256x128xf32> to vector<256x128xbf16>
    %c0_34 = arith.constant 0 : index
    %c0_35 = arith.constant 0 : index
    %c0_36 = arith.constant 0 : index
    %42 = vector.load %arg7[%c0_34, %c0_35, %c0_36] : memref<1x256x128xbf16, #tpu.memory_space<vmem>>, vector<1x256x128xbf16>
    %43 = vector.shape_cast %42 : vector<1x256x128xbf16> to vector<256x128xbf16>
    %44 = vector.shape_cast %41 : vector<256x128xbf16> to vector<1x256x128xbf16>
    tpu.vector_store %arg7[%c0_34, %c0_35, %c0_36], %44 {strides = array<i32>} : memref<1x256x128xbf16, #tpu.memory_space<vmem>>, vector<1x256x128xbf16>,
    return
  }
  func.func @transform_0(%arg0: i32) -> (i32, i32, i32) {
    %c0_i32 = arith.constant 0 : i32
    %c0_i32_0 = arith.constant 0 : i32
    %c0_i32_1 = arith.constant 0 : i32
    return %arg0, %c0_i32, %c0_i32_0 : i32, i32, i32
  }
  func.func @transform_1(%arg0: i32) -> (i32, i32) {
    %c0_i32 = arith.constant 0 : i32
    %c0_i32_0 = arith.constant 0 : i32
    %c0_i32_1 = arith.constant 0 : i32
    return %c0_i32, %c0_i32_0 : i32, i32
  }
  func.func @transform_2(%arg0: i32) -> (i32, i32) {
    %c0_i32 = arith.constant 0 : i32
    %c0_i32_0 = arith.constant 0 : i32
    %c0_i32_1 = arith.constant 0 : i32
    return %c0_i32, %c0_i32_0 : i32, i32
  }
  func.func @transform_3(%arg0: i32) -> (i32, i32) {
    %c0_i32 = arith.constant 0 : i32
    %c0_i32_0 = arith.constant 0 : i32
    %c0_i32_1 = arith.constant 0 : i32
    return %c0_i32, %c0_i32_0 : i32, i32
  }
  func.func @transform_4(%arg0: i32) -> (i32, i32) {
    %c0_i32 = arith.constant 0 : i32
    %c0_i32_0 = arith.constant 0 : i32
    %c0_i32_1 = arith.constant 0 : i32
    return %c0_i32, %c0_i32_0 : i32, i32
  }
  func.func @transform_5(%arg0: i32) -> (i32, i32) {
    %c0_i32 = arith.constant 0 : i32
    %c0_i32_0 = arith.constant 0 : i32
    %c0_i32_1 = arith.constant 0 : i32
    return %c0_i32, %c0_i32_0 : i32, i32
  }
  func.func @transform_6(%arg0: i32) -> (i32, i32, i32) {
    %c0_i32 = arith.constant 0 : i32
    %c0_i32_0 = arith.constant 0 : i32
    %c0_i32_1 = arith.constant 0 : i32
    return %arg0, %c0_i32, %c0_i32_0 : i32, i32, i32
  }
}

</mosaic_0001>

<llo_original>
// kernel: tpu_custom_call.1
$region0: #{tpu_custom_call.1}
  #allocation0 [shape = 'u32[]', space=smem, size = 0x4, offset = 0x4, fixed_abs, tag = 'smem constant byte address 0x4 - core index']
  #allocation1 [shape = 'u32[72,128]{1,0:T(1,128)}', space=vmem, size = 0x9000, scoped, tag = 'internal scratch']
  #allocation2 [shape = 'f32[256,128]{1,0:T(8,128)}', space=vmem, size = 0x20000, scoped, tag = 'scratch operand']
  %s0 = inlined_call_operand.vmem [shape: bf16[2,256,144], index: 0, kind: input, shape index: {}]
  %s1 = inlined_call_operand.vmem [shape: bf16[144,128], index: 1, kind: input, shape index: {}]
  %s2 = inlined_call_operand.vmem [shape: f32[1,128], index: 2, kind: input, shape index: {}]
  %s3 = inlined_call_operand.vmem [shape: f32[1,128], index: 3, kind: input, shape index: {}]
  %s4 = inlined_call_operand.vmem [shape: f32[128,32], index: 4, kind: input, shape index: {}]
  %s5 = inlined_call_operand.vmem [shape: f32[32,128], index: 5, kind: input, shape index: {}]
  %s6 = inlined_call_operand.hbm [shape: bf16[2,256,128], index: 6, kind: output, shape index: {}]
  %s7 = sld [smem:[#allocation0]]
  $region57: #{tpu_custom_call.1} parent=0
    _
  %s9 = ssub.s32 1, %s7
  %s10 = scalar_select 0, %s9, %s7
  $region1: #{tpu_custom_call.1} parent=0
    #allocation3 [shape = 'u8[131072]{0}', space=vmem, size = 0x20000, scoped, tag = 'output window, operand 0']
    #allocation4 [shape = 's32[2]{0}', space=sflag, size = 0x8, scoped, tag = 'scoped memory for tpu_custom_call.1']
    %11 = vsyncpa [#allocation4], 0
    %s12 = scalar_lea.sflag [#allocation4], 1
    %13 = vsyncpa %s12, 0
    loop: start=0, step=1, limit=4
    $region2: #{tpu_custom_call.1} parent=1 // loop_pre_header
      _
    $region3: #{tpu_custom_call.1} parent=1 // loop_header
      %s15 = sphi 0, %s19
      %p16 = scmp.ge.s32.totalorder %s15, 4
      %s25 = sphi 0, %s27
      %s28 = sphi 0, %s25
      %s29 = sphi 0, %s28
      %s45 = sphi 0, %s29
      %s49 = sphi 0, %s49
      %s51 = sphi 0, %s49
      %s52 = sphi 0, %s51
      %s66 = sphi 0, %s52
      %s70 = sphi 0, %s70
      %s72 = sphi 0, %s70
      %s73 = sphi 0, %s72
      %s87 = sphi 0, %s73
      %s91 = sphi 0, %s91
      %s93 = sphi 0, %s91
      %s94 = sphi 0, %s93
      %s108 = sphi 0, %s94
      %s112 = sphi 0, %s112
      %s114 = sphi 0, %s112
      %s115 = sphi 0, %s114
      %s129 = sphi 0, %s115
      %s133 = sphi 0, %s133
      %s135 = sphi 0, %s133
      %s136 = sphi 0, %s135
      %s150 = sphi 0, %s136
      %s156 = sphi 0, %s158
      %s159 = sphi 0, %s156
      %s160 = sphi 0, %s159
      %s176 = sphi 0, %s160
    $region4: #{tpu_custom_call.1} parent=1 // loop_header_branch
      %18 = sbr.rel (%p16) target = $region8
    $region5: #{tpu_custom_call.1} parent=1 // loop_body
      %s20 = ssub.s32 %s15, 1
      %s21 = ssub.s32 %s15, 2
      %s22 = sadd.s32 %s15, 1
      %s23 = ssub.s32 %s15, %s22
      %p24 = scmp.eq.s32.totalorder %s23, 0
      %s26 = sadd.s32 %s25, 1
      %s27 = scalar_select %p24, %s25, %s26
      %p30 = pneg %p24
      %p31 = scmp.eq.s32.totalorder %s15, 1
      %p32 = por %p30, %p31
      %p33 = scmp.ne.s32.totalorder %s25, %s28
      %p34 = scmp.eq.s32.totalorder %s15, 0
      %p35 = por %p33, %p34
      %p36 = scmp.ne.s32.totalorder %s25, %s28
      %p37 = scmp.eq.s32.totalorder %s20, 1
      %p38 = por %p36, %p37
      %p39 = scmp.ne.s32.totalorder %s28, %s29
      %p40 = scmp.eq.s32.totalorder %s20, 0
      %p41 = por %p39, %p40
      %p42 = scmp.ne.s32.totalorder %s28, %s29
      %p43 = scmp.eq.s32.totalorder %s21, 1
      %p44 = por %p42, %p43
      %p46 = scmp.ne.s32.totalorder %s29, %s45
      %p47 = scmp.eq.s32.totalorder %s21, 0
      %p48 = por %p46, %p47
      %s50 = sadd.s32 %s49, 1
      %p53 = scmp.eq.s32.totalorder %s15, 1
      %p54 = scmp.ne.s32.totalorder %s49, %s51
      %p55 = scmp.eq.s32.totalorder %s15, 0
      %p56 = por %p54, %p55
      %p57 = scmp.ne.s32.totalorder %s49, %s51
      %p58 = scmp.eq.s32.totalorder %s20, 1
      %p59 = por %p57, %p58
      %p60 = scmp.ne.s32.totalorder %s51, %s52
      %p61 = scmp.eq.s32.totalorder %s20, 0
      %p62 = por %p60, %p61
      %p63 = scmp.ne.s32.totalorder %s51, %s52
      %p64 = scmp.eq.s32.totalorder %s21, 1
      %p65 = por %p63, %p64
      %p67 = scmp.ne.s32.totalorder %s52, %s66
      %p68 = scmp.eq.s32.totalorder %s21, 0
      %p69 = por %p67, %p68
      %s71 = sadd.s32 %s70, 1
      %p74 = scmp.eq.s32.totalorder %s15, 1
      %p75 = scmp.ne.s32.totalorder %s70, %s72
      %p76 = scmp.eq.s32.totalorder %s15, 0
      %p77 = por %p75, %p76
      %p78 = scmp.ne.s32.totalorder %s70, %s72
      %p79 = scmp.eq.s32.totalorder %s20, 1
      %p80 = por %p78, %p79
      %p81 = scmp.ne.s32.totalorder %s72, %s73
      %p82 = scmp.eq.s32.totalorder %s20, 0
      %p83 = por %p81, %p82
      %p84 = scmp.ne.s32.totalorder %s72, %s73
      %p85 = scmp.eq.s32.totalorder %s21, 1
      %p86 = por %p84, %p85
      %p88 = scmp.ne.s32.totalorder %s73, %s87
      %p89 = scmp.eq.s32.totalorder %s21, 0
      %p90 = por %p88, %p89
      %s92 = sadd.s32 %s91, 1
      %p95 = scmp.eq.s32.totalorder %s15, 1
      %p96 = scmp.ne.s32.totalorder %s91, %s93
      %p97 = scmp.eq.s32.totalorder %s15, 0
      %p98 = por %p96, %p97
      %p99 = scmp.ne.s32.totalorder %s91, %s93
      %p100 = scmp.eq.s32.totalorder %s20, 1
      %p101 = por %p99, %p100
      %p102 = scmp.ne.s32.totalorder %s93, %s94
      %p103 = scmp.eq.s32.totalorder %s20, 0
      %p104 = por %p102, %p103
      %p105 = scmp.ne.s32.totalorder %s93, %s94
      %p106 = scmp.eq.s32.totalorder %s21, 1
      %p107 = por %p105, %p106
      %p109 = scmp.ne.s32.totalorder %s94, %s108
      %p110 = scmp.eq.s32.totalorder %s21, 0
      %p111 = por %p109, %p110
      %s113 = sadd.s32 %s112, 1
      %p116 = scmp.eq.s32.totalorder %s15, 1
      %p117 = scmp.ne.s32.totalorder %s112, %s114
      %p118 = scmp.eq.s32.totalorder %s15, 0
      %p119 = por %p117, %p118
      %p120 = scmp.ne.s32.totalorder %s112, %s114
      %p121 = scmp.eq.s32.totalorder %s20, 1
      %p122 = por %p120, %p121
      %p123 = scmp.ne.s32.totalorder %s114, %s115
      %p124 = scmp.eq.s32.totalorder %s20, 0
      %p125 = por %p123, %p124
      %p126 = scmp.ne.s32.totalorder %s114, %s115
      %p127 = scmp.eq.s32.totalorder %s21, 1
      %p128 = por %p126, %p127
      %p130 = scmp.ne.s32.totalorder %s115, %s129
      %p131 = scmp.eq.s32.totalorder %s21, 0
      %p132 = por %p130, %p131
      %s134 = sadd.s32 %s133, 1
      %p137 = scmp.eq.s32.totalorder %s15, 1
      %p138 = scmp.ne.s32.totalorder %s133, %s135
      %p139 = scmp.eq.s32.totalorder %s15, 0
      %p140 = por %p138, %p139
      %p141 = scmp.ne.s32.totalorder %s133, %s135
      %p142 = scmp.eq.s32.totalorder %s20, 1
      %p143 = por %p141, %p142
      %p144 = scmp.ne.s32.totalorder %s135, %s136
      %p145 = scmp.eq.s32.totalorder %s20, 0
      %p146 = por %p144, %p145
      %p147 = scmp.ne.s32.totalorder %s135, %s136
      %p148 = scmp.eq.s32.totalorder %s21, 1
      %p149 = por %p147, %p148
      %p151 = scmp.ne.s32.totalorder %s136, %s150
      %p152 = scmp.eq.s32.totalorder %s21, 0
      %p153 = por %p151, %p152
      %s154 = ssub.s32 %s15, %s22
      %p155 = scmp.eq.s32.totalorder %s154, 0
      %s157 = sadd.s32 %s156, 1
      %s158 = scalar_select %p155, %s156, %s157
      %p161 = pneg %p155
      %p162 = scmp.eq.s32.totalorder %s15, 1
      %p163 = por %p161, %p162
      %p164 = scmp.ne.s32.totalorder %s156, %s159
      %p165 = scmp.eq.s32.totalorder %s15, 0
      %p166 = por %p164, %p165
      %p167 = scmp.ne.s32.totalorder %s156, %s159
      %p168 = scmp.eq.s32.totalorder %s20, 1
      %p169 = por %p167, %p168
      %p170 = scmp.ne.s32.totalorder %s159, %s160
      %p171 = scmp.eq.s32.totalorder %s20, 0
      %p172 = por %p170, %p171
      %p173 = scmp.ne.s32.totalorder %s159, %s160
      %p174 = scmp.eq.s32.totalorder %s21, 1
      %p175 = por %p173, %p174
      %p177 = scmp.ne.s32.totalorder %s160, %s176
      %p178 = scmp.eq.s32.totalorder %s21, 0
      %p179 = por %p177, %p178
      %p180 = scmp.le.s32.totalorder 1, %s15
      %p181 = scmp.lt.s32.totalorder %s15, 3
      %p182 = pnand %p180, %p181
      %p183 = pneg %p182
      // Predicated region
      $region9: #{tpu_custom_call.1} parent=5 // pred_check
        _
      $region10: #{tpu_custom_call.1} parent=5 // pred_check_branch
        %185 = sbr.rel (%p182) target = $region12
      $region11: #{tpu_custom_call.1} parent=5 // pred_region
        %s186 = ssub.s32 %s15, 1
        // Predicated region
        $region13: #{tpu_custom_call.1} parent=11 // pred_check
          %p187 = pneg %p62
        $region14: #{tpu_custom_call.1} parent=11 // pred_check_branch
          %189 = sbr.rel (%p187) target = $region16
        $region15: #{tpu_custom_call.1} parent=11 // pred_region
          _
        $region16: #{tpu_custom_call.1} parent=11 // pred_fallthru
          _
        // Predicated region
        $region17: #{tpu_custom_call.1} parent=11 // pred_check
          %p190 = pneg %p83
        $region18: #{tpu_custom_call.1} parent=11 // pred_check_branch
          %192 = sbr.rel (%p190) target = $region20
        $region19: #{tpu_custom_call.1} parent=11 // pred_region
          _
        $region20: #{tpu_custom_call.1} parent=11 // pred_fallthru
          _
        // Predicated region
        $region21: #{tpu_custom_call.1} parent=11 // pred_check
          %p193 = pneg %p104
        $region22: #{tpu_custom_call.1} parent=11 // pred_check_branch
          %195 = sbr.rel (%p193) target = $region24
        $region23: #{tpu_custom_call.1} parent=11 // pred_region
          _
        $region24: #{tpu_custom_call.1} parent=11 // pred_fallthru
          _
        // Predicated region
        $region25: #{tpu_custom_call.1} parent=11 // pred_check
          %p196 = pneg %p125
        $region26: #{tpu_custom_call.1} parent=11 // pred_check_branch
          %198 = sbr.rel (%p196) target = $region28
        $region27: #{tpu_custom_call.1} parent=11 // pred_region
          _
        $region28: #{tpu_custom_call.1} parent=11 // pred_fallthru
          _
        // Predicated region
        $region29: #{tpu_custom_call.1} parent=11 // pred_check
          %p199 = pneg %p146
        $region30: #{tpu_custom_call.1} parent=11 // pred_check_branch
          %201 = sbr.rel (%p199) target = $region32
        $region31: #{tpu_custom_call.1} parent=11 // pred_region
          _
        $region32: #{tpu_custom_call.1} parent=11 // pred_fallthru
          _
      $region12: #{tpu_custom_call.1} parent=5 // pred_fallthru
        _
      %p202 = scmp.lt.s32.totalorder %s15, 2
      // Predicated region
      $region33: #{tpu_custom_call.1} parent=5 // pred_check
        %p203 = pneg %p202
      $region34: #{tpu_custom_call.1} parent=5 // pred_check_branch
        %205 = sbr.rel (%p203) target = $region36
      $region35: #{tpu_custom_call.1} parent=5 // pred_region
        // Predicated region
        $region37: #{tpu_custom_call.1} parent=35 // pred_check
          %p206 = pneg %p35
        $region38: #{tpu_custom_call.1} parent=35 // pred_check_branch
          %208 = sbr.rel (%p206) target = $region40
        $region39: #{tpu_custom_call.1} parent=35 // pred_region
          %p209 = scmp.lt.s32.totalorder %s15, 1
          %s210 = scalar_select %p209, %s15, 1
          %s211 = smul.addr %s210, 64
          %s212 = smul.addr %s211, 4
          %s213 = scalar_lea.vmem %s0, %s212
        $region40: #{tpu_custom_call.1} parent=35 // pred_fallthru
          _
      $region36: #{tpu_custom_call.1} parent=5 // pred_fallthru
        _
      %p214 = scmp.le.s32.totalorder 1, %s15
      %p215 = scmp.lt.s32.totalorder %s15, 3
      %p216 = pnand %p214, %p215
      %p217 = pneg %p216
      // Predicated region
      $region41: #{tpu_custom_call.1} parent=5 // pred_check
        _
      $region42: #{tpu_custom_call.1} parent=5 // pred_check_branch
        %219 = sbr.rel (%p216) target = $region44
      $region43: #{tpu_custom_call.1} parent=5 // pred_region
        %s220 = ssub.s32 %s15, 1
        %p221 = scmp.lt.s32.totalorder %s20, 1
        %s222 = scalar_select %p221, %s20, 1
        %s223 = smul.addr %s222, 64
        %s224 = smul.addr %s223, 4
        %s225 = scalar_lea.vmem %s0, %s224
        %p226 = pneg %p41
        %p227 = pneg %p38
        %p228 = pneg %p62
        %p229 = pneg %p59
        %p230 = pneg %p83
        %p231 = pneg %p80
        %p232 = pneg %p104
        %p233 = pneg %p101
        %p234 = pneg %p125
        %p235 = pneg %p122
        %p236 = pneg %p146
        %p237 = pneg %p143
        %p238 = pneg %p172
        %p239 = pneg %p169
        %s240 = sand.u32 %s159, 1
        %s241 = scalar_lea.sflag [#allocation4], %s240
        %s242 = sand.u32 %s159, 1
        %s243 = smul.addr %s242, 128
        %s244 = scalar_lea.vmem [#allocation3], %s243
        %p245 = scmp.lt.s32.totalorder %s20, 1
        %s246 = scalar_select %p245, %s20, 1
        %s247 = smul.addr %s246, 64
        %s248 = smul.addr %s247, 4
        %s249 = scalar_lea.vmem %s0, %s248
        %v251 = vld [vmem:[%s249] sm:$0xff]
        %v252 = vld [vmem:[%s249 + $0x8] sm:$0xff]
        %v253 = vld [vmem:[%s249 + $0x10] sm:$0xff]
        %v254 = vld [vmem:[%s249 + $0x18] sm:$0xff]
        %v255 = vld [vmem:[%s249 + $0x20] sm:$0xff]
        %v256 = vld [vmem:[%s249 + $0x28] sm:$0xff]
        %v257 = vld [vmem:[%s249 + $0x30] sm:$0xff]
        %v258 = vld [vmem:[%s249 + $0x38] sm:$0xff]
        %v259 = vld [vmem:[%s249 + $0x40] sm:$0xff]
        %v260 = vld [vmem:[%s249 + $0x48] sm:$0xff]
        %v261 = vld [vmem:[%s249 + $0x50] sm:$0xff]
        %v262 = vld [vmem:[%s249 + $0x58] sm:$0xff]
        %v263 = vld [vmem:[%s249 + $0x60] sm:$0xff]
        %v264 = vld [vmem:[%s249 + $0x68] sm:$0xff]
        %v265 = vld [vmem:[%s249 + $0x70] sm:$0xff]
        %v266 = vld [vmem:[%s249 + $0x78] sm:$0xff]
        %v267 = vld [vmem:[%s249 + $0x80] sm:$0xff]
        %v268 = vld [vmem:[%s249 + $0x88] sm:$0xff]
        %v269 = vld [vmem:[%s249 + $0x90] sm:$0xff]
        %v270 = vld [vmem:[%s249 + $0x98] sm:$0xff]
        %v271 = vld [vmem:[%s249 + $0xa0] sm:$0xff]
        %v272 = vld [vmem:[%s249 + $0xa8] sm:$0xff]
        %v273 = vld [vmem:[%s249 + $0xb0] sm:$0xff]
        %v274 = vld [vmem:[%s249 + $0xb8] sm:$0xff]
        %v275 = vld [vmem:[%s249 + $0xc0] sm:$0xff]
        %v276 = vld [vmem:[%s249 + $0xc8] sm:$0xff]
        %v277 = vld [vmem:[%s249 + $0xd0] sm:$0xff]
        %v278 = vld [vmem:[%s249 + $0xd8] sm:$0xff]
        %v279 = vld [vmem:[%s249 + $0xe0] sm:$0xff]
        %v280 = vld [vmem:[%s249 + $0xe8] sm:$0xff]
        %v281 = vld [vmem:[%s249 + $0xf0] sm:$0xff]
        %v282 = vld [vmem:[%s249 + $0xf8] sm:$0xff]
        %v283 = vld [vmem:[%s1] sm:$0xf]
        %v284 = vld [vmem:[%s1 + $0x4] sm:$0xf]
        %v285 = vld [vmem:[%s1 + $0x8] sm:$0xf]
        %v286 = vld [vmem:[%s1 + $0xc] sm:$0xf]
        %v287 = vld [vmem:[%s1 + $0x10] sm:$0xf]
        %v288 = vld [vmem:[%s1 + $0x14] sm:$0xf]
        %v289 = vld [vmem:[%s1 + $0x18] sm:$0xf]
        %v290 = vld [vmem:[%s1 + $0x1c] sm:$0xf]
        %v291 = vld [vmem:[%s1 + $0x20] sm:$0xf]
        %v292 = vld [vmem:[%s1 + $0x24] sm:$0xf]
        %v293 = vld [vmem:[%s1 + $0x28] sm:$0xf]
        %v294 = vld [vmem:[%s1 + $0x2c] sm:$0xf]
        %v295 = vld [vmem:[%s1 + $0x30] sm:$0xf]
        %v296 = vld [vmem:[%s1 + $0x34] sm:$0xf]
        %v297 = vld [vmem:[%s1 + $0x38] sm:$0xf]
        %v298 = vld [vmem:[%s1 + $0x3c] sm:$0xf]
        %v299 = vld [vmem:[%s1 + $0x40] sm:$0xf]
        %v300 = vld [vmem:[%s1 + $0x44] sm:$0xf]
        %v333 = vunpack.c.l.b16 %v251
        %v334 = vunpack.c.h.b16 %v251
        %v335 = vunpack.c.l.b16 %v252
        %v336 = vunpack.c.h.b16 %v252
        %v337 = vunpack.c.l.b16 %v253
        %v338 = vunpack.c.h.b16 %v253
        %v339 = vunpack.c.l.b16 %v254
        %v340 = vunpack.c.h.b16 %v254
        %v341 = vunpack.c.l.b16 %v255
        %v342 = vunpack.c.h.b16 %v255
        %v343 = vunpack.c.l.b16 %v256
        %v344 = vunpack.c.h.b16 %v256
        %v345 = vunpack.c.l.b16 %v257
        %v346 = vunpack.c.h.b16 %v257
        %v347 = vunpack.c.l.b16 %v258
        %v348 = vunpack.c.h.b16 %v258
        %v349 = vunpack.c.l.b16 %v259
        %v350 = vunpack.c.h.b16 %v259
        %v351 = vunpack.c.l.b16 %v260
        %v352 = vunpack.c.h.b16 %v260
        %v353 = vunpack.c.l.b16 %v261
        %v354 = vunpack.c.h.b16 %v261
        %v355 = vunpack.c.l.b16 %v262
        %v356 = vunpack.c.h.b16 %v262
        %v357 = vunpack.c.l.b16 %v263
        %v358 = vunpack.c.h.b16 %v263
        %v359 = vunpack.c.l.b16 %v264
        %v360 = vunpack.c.h.b16 %v264
        %v361 = vunpack.c.l.b16 %v265
        %v362 = vunpack.c.h.b16 %v265
        %v363 = vunpack.c.l.b16 %v266
        %v364 = vunpack.c.h.b16 %v266
        %v365 = vunpack.c.l.b16 %v267
        %v366 = vunpack.c.h.b16 %v267
        %v367 = vunpack.c.l.b16 %v268
        %v368 = vunpack.c.h.b16 %v268
        %v369 = vunpack.c.l.b16 %v269
        %v370 = vunpack.c.h.b16 %v269
        %v371 = vunpack.c.l.b16 %v270
        %v372 = vunpack.c.h.b16 %v270
        %v373 = vunpack.c.l.b16 %v271
        %v374 = vunpack.c.h.b16 %v271
        %v375 = vunpack.c.l.b16 %v272
        %v376 = vunpack.c.h.b16 %v272
        %v377 = vunpack.c.l.b16 %v273
        %v378 = vunpack.c.h.b16 %v273
        %v379 = vunpack.c.l.b16 %v274
        %v380 = vunpack.c.h.b16 %v274
        %v381 = vunpack.c.l.b16 %v275
        %v382 = vunpack.c.h.b16 %v275
        %v383 = vunpack.c.l.b16 %v276
        %v384 = vunpack.c.h.b16 %v276
        %v385 = vunpack.c.l.b16 %v277
        %v386 = vunpack.c.h.b16 %v277
        %v387 = vunpack.c.l.b16 %v278
        %v388 = vunpack.c.h.b16 %v278
        %v389 = vunpack.c.l.b16 %v279
        %v390 = vunpack.c.h.b16 %v279
        %v391 = vunpack.c.l.b16 %v280
        %v392 = vunpack.c.h.b16 %v280
        %v393 = vunpack.c.l.b16 %v281
        %v394 = vunpack.c.h.b16 %v281
        %v395 = vunpack.c.l.b16 %v282
        %v396 = vunpack.c.h.b16 %v282
        %v397 = vpack.c.b16 %v335, %v333
        %v398 = vpack.c.b16 %v336, %v334
        %v399 = vpack.c.b16 %v339, %v337
        %v400 = vpack.c.b16 %v340, %v338
        %v401 = vpack.c.b16 %v343, %v341
        %v402 = vpack.c.b16 %v344, %v342
        %v403 = vpack.c.b16 %v347, %v345
        %v404 = vpack.c.b16 %v348, %v346
        %v405 = vpack.c.b16 %v351, %v349
        %v406 = vpack.c.b16 %v352, %v350
        %v407 = vpack.c.b16 %v355, %v353
        %v408 = vpack.c.b16 %v356, %v354
        %v409 = vpack.c.b16 %v359, %v357
        %v410 = vpack.c.b16 %v360, %v358
        %v411 = vpack.c.b16 %v363, %v361
        %v412 = vpack.c.b16 %v364, %v362
        %v413 = vpack.c.b16 %v367, %v365
        %v414 = vpack.c.b16 %v368, %v366
        %v415 = vpack.c.b16 %v371, %v369
        %v416 = vpack.c.b16 %v372, %v370
        %v417 = vpack.c.b16 %v375, %v373
        %v418 = vpack.c.b16 %v376, %v374
        %v419 = vpack.c.b16 %v379, %v377
        %v420 = vpack.c.b16 %v380, %v378
        %v421 = vpack.c.b16 %v383, %v381
        %v422 = vpack.c.b16 %v384, %v382
        %v423 = vpack.c.b16 %v387, %v385
        %v424 = vpack.c.b16 %v388, %v386
        %v425 = vpack.c.b16 %v391, %v389
        %v426 = vpack.c.b16 %v392, %v390
        %v427 = vpack.c.b16 %v395, %v393
        %v428 = vpack.c.b16 %v396, %v394
        %v463 = vunpack.c.l.b16 %v283
        %v464 = vunpack.c.l.b16 %v284
        %v465 = vunpack.c.l.b16 %v285
        %v466 = vunpack.c.l.b16 %v286
        %v467 = vunpack.c.l.b16 %v287
        %v468 = vunpack.c.l.b16 %v288
        %v469 = vunpack.c.l.b16 %v289
        %v470 = vunpack.c.l.b16 %v290
        %v471 = vunpack.c.l.b16 %v291
        %v472 = vunpack.c.l.b16 %v292
        %v473 = vunpack.c.l.b16 %v293
        %v474 = vunpack.c.l.b16 %v294
        %v475 = vunpack.c.l.b16 %v295
        %v476 = vunpack.c.l.b16 %v296
        %v477 = vunpack.c.l.b16 %v297
        %v478 = vunpack.c.l.b16 %v298
        %v479 = vunpack.c.l.b16 %v299
        %v480 = vunpack.c.l.b16 %v300
        %v481 = vpack.c.b16 %v464, %v463
        %v482 = vpack.c.b16 %v466, %v465
        %v483 = vpack.c.b16 %v468, %v467
        %v484 = vpack.c.b16 %v470, %v469
        %v485 = vpack.c.b16 %v472, %v471
        %v486 = vpack.c.b16 %v474, %v473
        %v487 = vpack.c.b16 %v476, %v475
        %v488 = vpack.c.b16 %v478, %v477
        %v489 = vpack.c.b16 %v480, %v479
        %vm499 = vcmask 130048
        %v501 = vsel %vm499, %v398, 0
        %v504 = vsel %vm499, %v400, 0
        %v507 = vsel %vm499, %v402, 0
        %v510 = vsel %vm499, %v404, 0
        %v513 = vsel %vm499, %v406, 0
        %v516 = vsel %vm499, %v408, 0
        %v519 = vsel %vm499, %v410, 0
        %v522 = vsel %vm499, %v412, 0
        %v525 = vsel %vm499, %v414, 0
        %v528 = vsel %vm499, %v416, 0
        %v531 = vsel %vm499, %v418, 0
        %v534 = vsel %vm499, %v420, 0
        %v537 = vsel %vm499, %v422, 0
        %v540 = vsel %vm499, %v424, 0
        %v543 = vsel %vm499, %v426, 0
        %v546 = vsel %vm499, %v428, 0
        %548 = vmatpush.bf16.msra.mxu0 %v488
        %549 = vmatpush.bf16.msra.mxu0 %v487
        %550 = vmatpush.bf16.msra.mxu0 %v486
        %551 = vmatpush.bf16.msra.mxu0 %v485
        %552 = vmatpush.bf16.msra.mxu0 %v484
        %553 = vmatpush.bf16.msra.mxu0 %v483
        %554 = vmatpush.bf16.msra.mxu0 %v482
        %555 = vmatpush.bf16.msra.mxu0 %v481
        %556 = vmatmul.bf16.gmra.mxu0 %v397
        %v557 = vpop.f32.mrf.mxu0
        %v558 = vadd.f32 0.0, %v557
        %v559 = vpop.f32.mrf.mxu0
        %v560 = vadd.f32 0.0, %v559
        %561 = vmatmul.bf16.gmra.mxu0 %v399
        %v562 = vpop.f32.mrf.mxu0
        %v563 = vadd.f32 0.0, %v562
        %v564 = vpop.f32.mrf.mxu0
        %v565 = vadd.f32 0.0, %v564
        %566 = vmatmul.bf16.gmra.mxu0 %v401
        %v567 = vpop.f32.mrf.mxu0
        %v568 = vadd.f32 0.0, %v567
        %v569 = vpop.f32.mrf.mxu0
        %v570 = vadd.f32 0.0, %v569
        %571 = vmatmul.bf16.gmra.mxu0 %v403
        %v572 = vpop.f32.mrf.mxu0
        %v573 = vadd.f32 0.0, %v572
        %v574 = vpop.f32.mrf.mxu0
        %v575 = vadd.f32 0.0, %v574
        %576 = vmatmul.bf16.gmra.mxu0 %v405
        %v577 = vpop.f32.mrf.mxu0
        %v578 = vadd.f32 0.0, %v577
        %v579 = vpop.f32.mrf.mxu0
        %v580 = vadd.f32 0.0, %v579
        %581 = vmatmul.bf16.gmra.mxu0 %v407
        %v582 = vpop.f32.mrf.mxu0
        %v583 = vadd.f32 0.0, %v582
        %v584 = vpop.f32.mrf.mxu0
        %v585 = vadd.f32 0.0, %v584
        %586 = vmatmul.bf16.gmra.mxu0 %v409
        %v587 = vpop.f32.mrf.mxu0
        %v588 = vadd.f32 0.0, %v587
        %v589 = vpop.f32.mrf.mxu0
        %v590 = vadd.f32 0.0, %v589
        %591 = vmatmul.bf16.gmra.mxu0 %v411
        %v592 = vpop.f32.mrf.mxu0
        %v593 = vadd.f32 0.0, %v592
        %v594 = vpop.f32.mrf.mxu0
        %v595 = vadd.f32 0.0, %v594
        %596 = vmatmul.bf16.gmra.mxu0 %v413
        %v597 = vpop.f32.mrf.mxu0
        %v598 = vadd.f32 0.0, %v597
        %v599 = vpop.f32.mrf.mxu0
        %v600 = vadd.f32 0.0, %v599
        %601 = vmatmul.bf16.gmra.mxu0 %v415
        %v602 = vpop.f32.mrf.mxu0
        %v603 = vadd.f32 0.0, %v602
        %v604 = vpop.f32.mrf.mxu0
        %v605 = vadd.f32 0.0, %v604
        %606 = vmatmul.bf16.gmra.mxu0 %v417
        %v607 = vpop.f32.mrf.mxu0
        %v608 = vadd.f32 0.0, %v607
        %v609 = vpop.f32.mrf.mxu0
        %v610 = vadd.f32 0.0, %v609
        %611 = vmatmul.bf16.gmra.mxu0 %v419
        %v612 = vpop.f32.mrf.mxu0
        %v613 = vadd.f32 0.0, %v612
        %v614 = vpop.f32.mrf.mxu0
        %v615 = vadd.f32 0.0, %v614
        %616 = vmatmul.bf16.gmra.mxu0 %v421
        %v617 = vpop.f32.mrf.mxu0
        %v618 = vadd.f32 0.0, %v617
        %v619 = vpop.f32.mrf.mxu0
        %v620 = vadd.f32 0.0, %v619
        %621 = vmatmul.bf16.gmra.mxu0 %v423
        %v622 = vpop.f32.mrf.mxu0
        %v623 = vadd.f32 0.0, %v622
        %v624 = vpop.f32.mrf.mxu0
        %v625 = vadd.f32 0.0, %v624
        %626 = vmatmul.bf16.gmra.mxu0 %v425
        %v627 = vpop.f32.mrf.mxu0
        %v628 = vadd.f32 0.0, %v627
        %v629 = vpop.f32.mrf.mxu0
        %v630 = vadd.f32 0.0, %v629
        %631 = vmatmul.bf16.gmra.mxu0 %v427
        %v632 = vpop.f32.mrf.mxu0
        %v633 = vadd.f32 0.0, %v632
        %v634 = vpop.f32.mrf.mxu0
        %v635 = vadd.f32 0.0, %v634
        %636 = vdwg.mxu0
        %637 = vmatpush.bf16.msra.mxu0 0
        %638 = vmatpush.bf16.msra.mxu0 0
        %639 = vmatpush.bf16.msra.mxu0 0
        %640 = vmatpush.bf16.msra.mxu0 0
        %641 = vmatpush.bf16.msra.mxu0 0
        %642 = vmatpush.bf16.msra.mxu0 0
        %643 = vmatpush.bf16.msra.mxu0 0
        %644 = vmatpush.bf16.msra.mxu0 %v489
        %645 = vmatmul.bf16.gmra.mxu0 %v501
        %v646 = vpop.f32.mrf.mxu0
        %v647 = vadd.f32 %v558, %v646
        %v648 = vpop.f32.mrf.mxu0
        %v649 = vadd.f32 %v560, %v648
        %650 = vmatmul.bf16.gmra.mxu0 %v504
        %v651 = vpop.f32.mrf.mxu0
        %v652 = vadd.f32 %v563, %v651
        %v653 = vpop.f32.mrf.mxu0
        %v654 = vadd.f32 %v565, %v653
        %655 = vmatmul.bf16.gmra.mxu0 %v507
        %v656 = vpop.f32.mrf.mxu0
        %v657 = vadd.f32 %v568, %v656
        %v658 = vpop.f32.mrf.mxu0
        %v659 = vadd.f32 %v570, %v658
        %660 = vmatmul.bf16.gmra.mxu0 %v510
        %v661 = vpop.f32.mrf.mxu0
        %v662 = vadd.f32 %v573, %v661
        %v663 = vpop.f32.mrf.mxu0
        %v664 = vadd.f32 %v575, %v663
        %665 = vmatmul.bf16.gmra.mxu0 %v513
        %v666 = vpop.f32.mrf.mxu0
        %v667 = vadd.f32 %v578, %v666
        %v668 = vpop.f32.mrf.mxu0
        %v669 = vadd.f32 %v580, %v668
        %670 = vmatmul.bf16.gmra.mxu0 %v516
        %v671 = vpop.f32.mrf.mxu0
        %v672 = vadd.f32 %v583, %v671
        %v673 = vpop.f32.mrf.mxu0
        %v674 = vadd.f32 %v585, %v673
        %675 = vmatmul.bf16.gmra.mxu0 %v519
        %v676 = vpop.f32.mrf.mxu0
        %v677 = vadd.f32 %v588, %v676
        %v678 = vpop.f32.mrf.mxu0
        %v679 = vadd.f32 %v590, %v678
        %680 = vmatmul.bf16.gmra.mxu0 %v522
        %v681 = vpop.f32.mrf.mxu0
        %v682 = vadd.f32 %v593, %v681
        %v683 = vpop.f32.mrf.mxu0
        %v684 = vadd.f32 %v595, %v683
        %685 = vmatmul.bf16.gmra.mxu0 %v525
        %v686 = vpop.f32.mrf.mxu0
        %v687 = vadd.f32 %v598, %v686
        %v688 = vpop.f32.mrf.mxu0
        %v689 = vadd.f32 %v600, %v688
        %690 = vmatmul.bf16.gmra.mxu0 %v528
        %v691 = vpop.f32.mrf.mxu0
        %v692 = vadd.f32 %v603, %v691
        %v693 = vpop.f32.mrf.mxu0
        %v694 = vadd.f32 %v605, %v693
        %695 = vmatmul.bf16.gmra.mxu0 %v531
        %v696 = vpop.f32.mrf.mxu0
        %v697 = vadd.f32 %v608, %v696
        %v698 = vpop.f32.mrf.mxu0
        %v699 = vadd.f32 %v610, %v698
        %700 = vmatmul.bf16.gmra.mxu0 %v534
        %v701 = vpop.f32.mrf.mxu0
        %v702 = vadd.f32 %v613, %v701
        %v703 = vpop.f32.mrf.mxu0
        %v704 = vadd.f32 %v615, %v703
        %705 = vmatmul.bf16.gmra.mxu0 %v537
        %v706 = vpop.f32.mrf.mxu0
        %v707 = vadd.f32 %v618, %v706
        %v708 = vpop.f32.mrf.mxu0
        %v709 = vadd.f32 %v620, %v708
        %710 = vmatmul.bf16.gmra.mxu0 %v540
        %v711 = vpop.f32.mrf.mxu0
        %v712 = vadd.f32 %v623, %v711
        %v713 = vpop.f32.mrf.mxu0
        %v714 = vadd.f32 %v625, %v713
        %715 = vmatmul.bf16.gmra.mxu0 %v543
        %v716 = vpop.f32.mrf.mxu0
        %v717 = vadd.f32 %v628, %v716
        %v718 = vpop.f32.mrf.mxu0
        %v719 = vadd.f32 %v630, %v718
        %720 = vmatmul.bf16.gmra.mxu0 %v546
        %v721 = vpop.f32.mrf.mxu0
        %v722 = vadd.f32 %v633, %v721
        %v723 = vpop.f32.mrf.mxu0
        %v724 = vadd.f32 %v635, %v723
        %725 = vdwg.mxu0
        %726 = vst [vmem:[#allocation2] sm:$0xff] %v647
        %727 = vst [vmem:[#allocation2 + $0x8] sm:$0xff] %v649
        %728 = vst [vmem:[#allocation2 + $0x10] sm:$0xff] %v652
        %729 = vst [vmem:[#allocation2 + $0x18] sm:$0xff] %v654
        %730 = vst [vmem:[#allocation2 + $0x20] sm:$0xff] %v657
        %731 = vst [vmem:[#allocation2 + $0x28] sm:$0xff] %v659
        %732 = vst [vmem:[#allocation2 + $0x30] sm:$0xff] %v662
        %733 = vst [vmem:[#allocation2 + $0x38] sm:$0xff] %v664
        %734 = vst [vmem:[#allocation2 + $0x40] sm:$0xff] %v667
        %735 = vst [vmem:[#allocation2 + $0x48] sm:$0xff] %v669
        %736 = vst [vmem:[#allocation2 + $0x50] sm:$0xff] %v672
        %737 = vst [vmem:[#allocation2 + $0x58] sm:$0xff] %v674
        %738 = vst [vmem:[#allocation2 + $0x60] sm:$0xff] %v677
        %739 = vst [vmem:[#allocation2 + $0x68] sm:$0xff] %v679
        %740 = vst [vmem:[#allocation2 + $0x70] sm:$0xff] %v682
        %741 = vst [vmem:[#allocation2 + $0x78] sm:$0xff] %v684
        %742 = vst [vmem:[#allocation2 + $0x80] sm:$0xff] %v687
        %743 = vst [vmem:[#allocation2 + $0x88] sm:$0xff] %v689
        %744 = vst [vmem:[#allocation2 + $0x90] sm:$0xff] %v692
        %745 = vst [vmem:[#allocation2 + $0x98] sm:$0xff] %v694
        %746 = vst [vmem:[#allocation2 + $0xa0] sm:$0xff] %v697
        %747 = vst [vmem:[#allocation2 + $0xa8] sm:$0xff] %v699
        %748 = vst [vmem:[#allocation2 + $0xb0] sm:$0xff] %v702
        %749 = vst [vmem:[#allocation2 + $0xb8] sm:$0xff] %v704
        %750 = vst [vmem:[#allocation2 + $0xc0] sm:$0xff] %v707
        %751 = vst [vmem:[#allocation2 + $0xc8] sm:$0xff] %v709
        %752 = vst [vmem:[#allocation2 + $0xd0] sm:$0xff] %v712
        %753 = vst [vmem:[#allocation2 + $0xd8] sm:$0xff] %v714
        %754 = vst [vmem:[#allocation2 + $0xe0] sm:$0xff] %v717
        %755 = vst [vmem:[#allocation2 + $0xe8] sm:$0xff] %v719
        %756 = vst [vmem:[#allocation2 + $0xf0] sm:$0xff] %v722
        %757 = vst [vmem:[#allocation2 + $0xf8] sm:$0xff] %v724
        %v758 = vld [vmem:[#allocation2] sm:$0xff]
        %v759 = vld [vmem:[#allocation2 + $0x8] sm:$0xff]
        %v760 = vld [vmem:[#allocation2 + $0x10] sm:$0xff]
        %v761 = vld [vmem:[#allocation2 + $0x18] sm:$0xff]
        %v762 = vld [vmem:[#allocation2 + $0x20] sm:$0xff]
        %v763 = vld [vmem:[#allocation2 + $0x28] sm:$0xff]
        %v764 = vld [vmem:[#allocation2 + $0x30] sm:$0xff]
        %v765 = vld [vmem:[#allocation2 + $0x38] sm:$0xff]
        %v766 = vld [vmem:[#allocation2 + $0x40] sm:$0xff]
        %v767 = vld [vmem:[#allocation2 + $0x48] sm:$0xff]
        %v768 = vld [vmem:[#allocation2 + $0x50] sm:$0xff]
        %v769 = vld [vmem:[#allocation2 + $0x58] sm:$0xff]
        %v770 = vld [vmem:[#allocation2 + $0x60] sm:$0xff]
        %v771 = vld [vmem:[#allocation2 + $0x68] sm:$0xff]
        %v772 = vld [vmem:[#allocation2 + $0x70] sm:$0xff]
        %v773 = vld [vmem:[#allocation2 + $0x78] sm:$0xff]
        %v774 = vld [vmem:[#allocation2 + $0x80] sm:$0xff]
        %v775 = vld [vmem:[#allocation2 + $0x88] sm:$0xff]
        %v776 = vld [vmem:[#allocation2 + $0x90] sm:$0xff]
        %v777 = vld [vmem:[#allocation2 + $0x98] sm:$0xff]
        %v778 = vld [vmem:[#allocation2 + $0xa0] sm:$0xff]
        %v779 = vld [vmem:[#allocation2 + $0xa8] sm:$0xff]
        %v780 = vld [vmem:[#allocation2 + $0xb0] sm:$0xff]
        %v781 = vld [vmem:[#allocation2 + $0xb8] sm:$0xff]
        %v782 = vld [vmem:[#allocation2 + $0xc0] sm:$0xff]
        %v783 = vld [vmem:[#allocation2 + $0xc8] sm:$0xff]
        %v784 = vld [vmem:[#allocation2 + $0xd0] sm:$0xff]
        %v785 = vld [vmem:[#allocation2 + $0xd8] sm:$0xff]
        %v786 = vld [vmem:[#allocation2 + $0xe0] sm:$0xff]
        %v787 = vld [vmem:[#allocation2 + $0xe8] sm:$0xff]
        %v788 = vld [vmem:[#allocation2 + $0xf0] sm:$0xff]
        %v789 = vld [vmem:[#allocation2 + $0xf8] sm:$0xff]
        %v790 = vadd.f32 %v758, %v759
        %v791 = vadd.f32 %v790, %v760
        %v792 = vadd.f32 %v791, %v761
        %v793 = vadd.f32 %v792, %v762
        %v794 = vadd.f32 %v793, %v763
        %v795 = vadd.f32 %v794, %v764
        %v796 = vadd.f32 %v795, %v765
        %v797 = vadd.f32 %v796, %v766
        %v798 = vadd.f32 %v797, %v767
        %v799 = vadd.f32 %v798, %v768
        %v800 = vadd.f32 %v799, %v769
        %v801 = vadd.f32 %v800, %v770
        %v802 = vadd.f32 %v801, %v771
        %v803 = vadd.f32 %v802, %v772
        %v804 = vadd.f32 %v803, %v773
        %v805 = vadd.f32 %v804, %v774
        %v806 = vadd.f32 %v805, %v775
        %v807 = vadd.f32 %v806, %v776
        %v808 = vadd.f32 %v807, %v777
        %v809 = vadd.f32 %v808, %v778
        %v810 = vadd.f32 %v809, %v779
        %v811 = vadd.f32 %v810, %v780
        %v812 = vadd.f32 %v811, %v781
        %v813 = vadd.f32 %v812, %v782
        %v814 = vadd.f32 %v813, %v783
        %v815 = vadd.f32 %v814, %v784
        %v816 = vadd.f32 %v815, %v785
        %v817 = vadd.f32 %v816, %v786
        %v818 = vadd.f32 %v817, %v787
        %v819 = vadd.f32 %v818, %v788
        %v820 = vadd.f32 %v819, %v789
        %v821 = vrot.slane %v820, 4
        %v822 = vadd.f32 %v820, %v821
        %v823 = vrot.slane %v822, 2
        %v824 = vadd.f32 %v822, %v823
        %v825 = vrot.slane %v824, 1
        %v826 = vadd.f32 %v824, %v825
        %v827 = vld [vmem:[%s4] sm:$0xff]
        %v828 = vld [vmem:[%s4 + $0x8] sm:$0xff]
        %v829 = vld [vmem:[%s4 + $0x10] sm:$0xff]
        %v830 = vld [vmem:[%s4 + $0x18] sm:$0xff]
        %v831 = vld [vmem:[%s4 + $0x20] sm:$0xff]
        %v832 = vld [vmem:[%s4 + $0x28] sm:$0xff]
        %v833 = vld [vmem:[%s4 + $0x30] sm:$0xff]
        %v834 = vld [vmem:[%s4 + $0x38] sm:$0xff]
        %v835 = vld [vmem:[%s4 + $0x40] sm:$0xff]
        %v836 = vld [vmem:[%s4 + $0x48] sm:$0xff]
        %v837 = vld [vmem:[%s4 + $0x50] sm:$0xff]
        %v838 = vld [vmem:[%s4 + $0x58] sm:$0xff]
        %v839 = vld [vmem:[%s4 + $0x60] sm:$0xff]
        %v840 = vld [vmem:[%s4 + $0x68] sm:$0xff]
        %v841 = vld [vmem:[%s4 + $0x70] sm:$0xff]
        %v842 = vld [vmem:[%s4 + $0x78] sm:$0xff]
        %v843 = vand.u32 %v842, 4294901760
        %844 = vmatpush.msra.mxu0 %v843
        %v845 = vand.u32 %v841, 4294901760
        %846 = vmatpush.msra.mxu0 %v845
        %v847 = vand.u32 %v840, 4294901760
        %848 = vmatpush.msra.mxu0 %v847
        %v849 = vand.u32 %v839, 4294901760
        %850 = vmatpush.msra.mxu0 %v849
        %v851 = vand.u32 %v838, 4294901760
        %852 = vmatpush.msra.mxu0 %v851
        %v853 = vand.u32 %v837, 4294901760
        %854 = vmatpush.msra.mxu0 %v853
        %v855 = vand.u32 %v836, 4294901760
        %856 = vmatpush.msra.mxu0 %v855
        %v857 = vand.u32 %v835, 4294901760
        %858 = vmatpush.msra.mxu0 %v857
        %v859 = vand.u32 %v834, 4294901760
        %860 = vmatpush.msra.mxu0 %v859
        %v861 = vand.u32 %v833, 4294901760
        %862 = vmatpush.msra.mxu0 %v861
        %v863 = vand.u32 %v832, 4294901760
        %864 = vmatpush.msra.mxu0 %v863
        %v865 = vand.u32 %v831, 4294901760
        %866 = vmatpush.msra.mxu0 %v865
        %v867 = vand.u32 %v830, 4294901760
        %868 = vmatpush.msra.mxu0 %v867
        %v869 = vand.u32 %v829, 4294901760
        %870 = vmatpush.msra.mxu0 %v869
        %v871 = vand.u32 %v828, 4294901760
        %872 = vmatpush.msra.mxu0 %v871
        %v873 = vand.u32 %v827, 4294901760
        %874 = vmatpush.msra.mxu0 %v873
        %v875 = vand.u32 %v826, 4294901760
        %v876 = vsub.f32 %v826, %v875
        %v877 = vand.u32 %v876, 4294901760
        %v878 = vsub.f32 %v876, %v877
        %v879 = vand.u32 %v878, 4294901760
        %880 = vmatmul.f32.gmra.mxu0 %v879
        %v881 = vpop.f32.mrf.mxu0
        %v882 = vadd.f32 0.0, %v881
        %883 = vdwg.mxu0
        %v884 = vand.u32 %v842, 4294901760
        %v885 = vsub.f32 %v842, %v884
        %v886 = vand.u32 %v885, 4294901760
        %v887 = vsub.f32 %v885, %v886
        %v888 = vand.u32 %v887, 4294901760
        %889 = vmatpush.msra.mxu0 %v888
        %v890 = vand.u32 %v841, 4294901760
        %v891 = vsub.f32 %v841, %v890
        %v892 = vand.u32 %v891, 4294901760
        %v893 = vsub.f32 %v891, %v892
        %v894 = vand.u32 %v893, 4294901760
        %895 = vmatpush.msra.mxu0 %v894
        %v896 = vand.u32 %v840, 4294901760
        %v897 = vsub.f32 %v840, %v896
        %v898 = vand.u32 %v897, 4294901760
        %v899 = vsub.f32 %v897, %v898
        %v900 = vand.u32 %v899, 4294901760
        %901 = vmatpush.msra.mxu0 %v900
        %v902 = vand.u32 %v839, 4294901760
        %v903 = vsub.f32 %v839, %v902
        %v904 = vand.u32 %v903, 4294901760
        %v905 = vsub.f32 %v903, %v904
        %v906 = vand.u32 %v905, 4294901760
        %907 = vmatpush.msra.mxu0 %v906
        %v908 = vand.u32 %v838, 4294901760
        %v909 = vsub.f32 %v838, %v908
        %v910 = vand.u32 %v909, 4294901760
        %v911 = vsub.f32 %v909, %v910
        %v912 = vand.u32 %v911, 4294901760
        %913 = vmatpush.msra.mxu0 %v912
        %v914 = vand.u32 %v837, 4294901760
        %v915 = vsub.f32 %v837, %v914
        %v916 = vand.u32 %v915, 4294901760
        %v917 = vsub.f32 %v915, %v916
        %v918 = vand.u32 %v917, 4294901760
        %919 = vmatpush.msra.mxu0 %v918
        %v920 = vand.u32 %v836, 4294901760
        %v921 = vsub.f32 %v836, %v920
        %v922 = vand.u32 %v921, 4294901760
        %v923 = vsub.f32 %v921, %v922
        %v924 = vand.u32 %v923, 4294901760
        %925 = vmatpush.msra.mxu0 %v924
        %v926 = vand.u32 %v835, 4294901760
        %v927 = vsub.f32 %v835, %v926
        %v928 = vand.u32 %v927, 4294901760
        %v929 = vsub.f32 %v927, %v928
        %v930 = vand.u32 %v929, 4294901760
        %931 = vmatpush.msra.mxu0 %v930
        %v932 = vand.u32 %v834, 4294901760
        %v933 = vsub.f32 %v834, %v932
        %v934 = vand.u32 %v933, 4294901760
        %v935 = vsub.f32 %v933, %v934
        %v936 = vand.u32 %v935, 4294901760
        %937 = vmatpush.msra.mxu0 %v936
        %v938 = vand.u32 %v833, 4294901760
        %v939 = vsub.f32 %v833, %v938
        %v940 = vand.u32 %v939, 4294901760
        %v941 = vsub.f32 %v939, %v940
        %v942 = vand.u32 %v941, 4294901760
        %943 = vmatpush.msra.mxu0 %v942
        %v944 = vand.u32 %v832, 4294901760
        %v945 = vsub.f32 %v832, %v944
        %v946 = vand.u32 %v945, 4294901760
        %v947 = vsub.f32 %v945, %v946
        %v948 = vand.u32 %v947, 4294901760
        %949 = vmatpush.msra.mxu0 %v948
        %v950 = vand.u32 %v831, 4294901760
        %v951 = vsub.f32 %v831, %v950
        %v952 = vand.u32 %v951, 4294901760
        %v953 = vsub.f32 %v951, %v952
        %v954 = vand.u32 %v953, 4294901760
        %955 = vmatpush.msra.mxu0 %v954
        %v956 = vand.u32 %v830, 4294901760
        %v957 = vsub.f32 %v830, %v956
        %v958 = vand.u32 %v957, 4294901760
        %v959 = vsub.f32 %v957, %v958
        %v960 = vand.u32 %v959, 4294901760
        %961 = vmatpush.msra.mxu0 %v960
        %v962 = vand.u32 %v829, 4294901760
        %v963 = vsub.f32 %v829, %v962
        %v964 = vand.u32 %v963, 4294901760
        %v965 = vsub.f32 %v963, %v964
        %v966 = vand.u32 %v965, 4294901760
        %967 = vmatpush.msra.mxu0 %v966
        %v968 = vand.u32 %v828, 4294901760
        %v969 = vsub.f32 %v828, %v968
        %v970 = vand.u32 %v969, 4294901760
        %v971 = vsub.f32 %v969, %v970
        %v972 = vand.u32 %v971, 4294901760
        %973 = vmatpush.msra.mxu0 %v972
        %v974 = vand.u32 %v827, 4294901760
        %v975 = vsub.f32 %v827, %v974
        %v976 = vand.u32 %v975, 4294901760
        %v977 = vsub.f32 %v975, %v976
        %v978 = vand.u32 %v977, 4294901760
        %979 = vmatpush.msra.mxu0 %v978
        %v980 = vand.u32 %v826, 4294901760
        %981 = vmatmul.f32.gmra.mxu0 %v980
        %v982 = vpop.f32.mrf.mxu0
        %v983 = vadd.f32 %v882, %v982
        %984 = vdwg.mxu0
        %v985 = vand.u32 %v842, 4294901760
        %v986 = vsub.f32 %v842, %v985
        %987 = vmatpush.msra.mxu0 %v986
        %v988 = vand.u32 %v841, 4294901760
        %v989 = vsub.f32 %v841, %v988
        %990 = vmatpush.msra.mxu0 %v989
        %v991 = vand.u32 %v840, 4294901760
        %v992 = vsub.f32 %v840, %v991
        %993 = vmatpush.msra.mxu0 %v992
        %v994 = vand.u32 %v839, 4294901760
        %v995 = vsub.f32 %v839, %v994
        %996 = vmatpush.msra.mxu0 %v995
        %v997 = vand.u32 %v838, 4294901760
        %v998 = vsub.f32 %v838, %v997
        %999 = vmatpush.msra.mxu0 %v998
        %v1000 = vand.u32 %v837, 4294901760
        %v1001 = vsub.f32 %v837, %v1000
        %1002 = vmatpush.msra.mxu0 %v1001
        %v1003 = vand.u32 %v836, 4294901760
        %v1004 = vsub.f32 %v836, %v1003
        %1005 = vmatpush.msra.mxu0 %v1004
        %v1006 = vand.u32 %v835, 4294901760
        %v1007 = vsub.f32 %v835, %v1006
        %1008 = vmatpush.msra.mxu0 %v1007
        %v1009 = vand.u32 %v834, 4294901760
        %v1010 = vsub.f32 %v834, %v1009
        %1011 = vmatpush.msra.mxu0 %v1010
        %v1012 = vand.u32 %v833, 4294901760
        %v1013 = vsub.f32 %v833, %v1012
        %1014 = vmatpush.msra.mxu0 %v1013
        %v1015 = vand.u32 %v832, 4294901760
        %v1016 = vsub.f32 %v832, %v1015
        %1017 = vmatpush.msra.mxu0 %v1016
        %v1018 = vand.u32 %v831, 4294901760
        %v1019 = vsub.f32 %v831, %v1018
        %1020 = vmatpush.msra.mxu0 %v1019
        %v1021 = vand.u32 %v830, 4294901760
        %v1022 = vsub.f32 %v830, %v1021
        %1023 = vmatpush.msra.mxu0 %v1022
        %v1024 = vand.u32 %v829, 4294901760
        %v1025 = vsub.f32 %v829, %v1024
        %1026 = vmatpush.msra.mxu0 %v1025
        %v1027 = vand.u32 %v828, 4294901760
        %v1028 = vsub.f32 %v828, %v1027
        %1029 = vmatpush.msra.mxu0 %v1028
        %v1030 = vand.u32 %v827, 4294901760
        %v1031 = vsub.f32 %v827, %v1030
        %1032 = vmatpush.msra.mxu0 %v1031
        %v1033 = vand.u32 %v826, 4294901760
        %v1034 = vsub.f32 %v826, %v1033
        %1035 = vmatmul.f32.gmra.mxu0 %v1034
        %v1036 = vpop.f32.mrf.mxu0
        %v1037 = vadd.f32 %v983, %v1036
        %1038 = vdwg.mxu0
        %v1039 = vand.u32 %v842, 4294901760
        %1040 = vmatpush.msra.mxu0 %v1039
        %v1041 = vand.u32 %v841, 4294901760
        %1042 = vmatpush.msra.mxu0 %v1041
        %v1043 = vand.u32 %v840, 4294901760
        %1044 = vmatpush.msra.mxu0 %v1043
        %v1045 = vand.u32 %v839, 4294901760
        %1046 = vmatpush.msra.mxu0 %v1045
        %v1047 = vand.u32 %v838, 4294901760
        %1048 = vmatpush.msra.mxu0 %v1047
        %v1049 = vand.u32 %v837, 4294901760
        %1050 = vmatpush.msra.mxu0 %v1049
        %v1051 = vand.u32 %v836, 4294901760
        %1052 = vmatpush.msra.mxu0 %v1051
        %v1053 = vand.u32 %v835, 4294901760
        %1054 = vmatpush.msra.mxu0 %v1053
        %v1055 = vand.u32 %v834, 4294901760
        %1056 = vmatpush.msra.mxu0 %v1055
        %v1057 = vand.u32 %v833, 4294901760
        %1058 = vmatpush.msra.mxu0 %v1057
        %v1059 = vand.u32 %v832, 4294901760
        %1060 = vmatpush.msra.mxu0 %v1059
        %v1061 = vand.u32 %v831, 4294901760
        %1062 = vmatpush.msra.mxu0 %v1061
        %v1063 = vand.u32 %v830, 4294901760
        %1064 = vmatpush.msra.mxu0 %v1063
        %v1065 = vand.u32 %v829, 4294901760
        %1066 = vmatpush.msra.mxu0 %v1065
        %v1067 = vand.u32 %v828, 4294901760
        %1068 = vmatpush.msra.mxu0 %v1067
        %v1069 = vand.u32 %v827, 4294901760
        %1070 = vmatpush.msra.mxu0 %v1069
        %v1071 = vand.u32 %v826, 4294901760
        %v1072 = vsub.f32 %v826, %v1071
        %v1073 = vand.u32 %v1072, 4294901760
        %1074 = vmatmul.f32.gmra.mxu0 %v1073
        %v1075 = vpop.f32.mrf.mxu0
        %v1076 = vadd.f32 %v1037, %v1075
        %1077 = vdwg.mxu0
        %v1078 = vand.u32 %v842, 4294901760
        %v1079 = vsub.f32 %v842, %v1078
        %v1080 = vand.u32 %v1079, 4294901760
        %1081 = vmatpush.msra.mxu0 %v1080
        %v1082 = vand.u32 %v841, 4294901760
        %v1083 = vsub.f32 %v841, %v1082
        %v1084 = vand.u32 %v1083, 4294901760
        %1085 = vmatpush.msra.mxu0 %v1084
        %v1086 = vand.u32 %v840, 4294901760
        %v1087 = vsub.f32 %v840, %v1086
        %v1088 = vand.u32 %v1087, 4294901760
        %1089 = vmatpush.msra.mxu0 %v1088
        %v1090 = vand.u32 %v839, 4294901760
        %v1091 = vsub.f32 %v839, %v1090
        %v1092 = vand.u32 %v1091, 4294901760
        %1093 = vmatpush.msra.mxu0 %v1092
        %v1094 = vand.u32 %v838, 4294901760
        %v1095 = vsub.f32 %v838, %v1094
        %v1096 = vand.u32 %v1095, 4294901760
        %1097 = vmatpush.msra.mxu0 %v1096
        %v1098 = vand.u32 %v837, 4294901760
        %v1099 = vsub.f32 %v837, %v1098
        %v1100 = vand.u32 %v1099, 4294901760
        %1101 = vmatpush.msra.mxu0 %v1100
        %v1102 = vand.u32 %v836, 4294901760
        %v1103 = vsub.f32 %v836, %v1102
        %v1104 = vand.u32 %v1103, 4294901760
        %1105 = vmatpush.msra.mxu0 %v1104
        %v1106 = vand.u32 %v835, 4294901760
        %v1107 = vsub.f32 %v835, %v1106
        %v1108 = vand.u32 %v1107, 4294901760
        %1109 = vmatpush.msra.mxu0 %v1108
        %v1110 = vand.u32 %v834, 4294901760
        %v1111 = vsub.f32 %v834, %v1110
        %v1112 = vand.u32 %v1111, 4294901760
        %1113 = vmatpush.msra.mxu0 %v1112
        %v1114 = vand.u32 %v833, 4294901760
        %v1115 = vsub.f32 %v833, %v1114
        %v1116 = vand.u32 %v1115, 4294901760
        %1117 = vmatpush.msra.mxu0 %v1116
        %v1118 = vand.u32 %v832, 4294901760
        %v1119 = vsub.f32 %v832, %v1118
        %v1120 = vand.u32 %v1119, 4294901760
        %1121 = vmatpush.msra.mxu0 %v1120
        %v1122 = vand.u32 %v831, 4294901760
        %v1123 = vsub.f32 %v831, %v1122
        %v1124 = vand.u32 %v1123, 4294901760
        %1125 = vmatpush.msra.mxu0 %v1124
        %v1126 = vand.u32 %v830, 4294901760
        %v1127 = vsub.f32 %v830, %v1126
        %v1128 = vand.u32 %v1127, 4294901760
        %1129 = vmatpush.msra.mxu0 %v1128
        %v1130 = vand.u32 %v829, 4294901760
        %v1131 = vsub.f32 %v829, %v1130
        %v1132 = vand.u32 %v1131, 4294901760
        %1133 = vmatpush.msra.mxu0 %v1132
        %v1134 = vand.u32 %v828, 4294901760
        %v1135 = vsub.f32 %v828, %v1134
        %v1136 = vand.u32 %v1135, 4294901760
        %1137 = vmatpush.msra.mxu0 %v1136
        %v1138 = vand.u32 %v827, 4294901760
        %v1139 = vsub.f32 %v827, %v1138
        %v1140 = vand.u32 %v1139, 4294901760
        %1141 = vmatpush.msra.mxu0 %v1140
        %v1142 = vand.u32 %v826, 4294901760
        %1143 = vmatmul.f32.gmra.mxu0 %v1142
        %v1144 = vpop.f32.mrf.mxu0
        %v1145 = vadd.f32 %v1076, %v1144
        %1146 = vdwg.mxu0
        %v1147 = vand.u32 %v842, 4294901760
        %1148 = vmatpush.msra.mxu0 %v1147
        %v1149 = vand.u32 %v841, 4294901760
        %1150 = vmatpush.msra.mxu0 %v1149
        %v1151 = vand.u32 %v840, 4294901760
        %1152 = vmatpush.msra.mxu0 %v1151
        %v1153 = vand.u32 %v839, 4294901760
        %1154 = vmatpush.msra.mxu0 %v1153
        %v1155 = vand.u32 %v838, 4294901760
        %1156 = vmatpush.msra.mxu0 %v1155
        %v1157 = vand.u32 %v837, 4294901760
        %1158 = vmatpush.msra.mxu0 %v1157
        %v1159 = vand.u32 %v836, 4294901760
        %1160 = vmatpush.msra.mxu0 %v1159
        %v1161 = vand.u32 %v835, 4294901760
        %1162 = vmatpush.msra.mxu0 %v1161
        %v1163 = vand.u32 %v834, 4294901760
        %1164 = vmatpush.msra.mxu0 %v1163
        %v1165 = vand.u32 %v833, 4294901760
        %1166 = vmatpush.msra.mxu0 %v1165
        %v1167 = vand.u32 %v832, 4294901760
        %1168 = vmatpush.msra.mxu0 %v1167
        %v1169 = vand.u32 %v831, 4294901760
        %1170 = vmatpush.msra.mxu0 %v1169
        %v1171 = vand.u32 %v830, 4294901760
        %1172 = vmatpush.msra.mxu0 %v1171
        %v1173 = vand.u32 %v829, 4294901760
        %1174 = vmatpush.msra.mxu0 %v1173
        %v1175 = vand.u32 %v828, 4294901760
        %1176 = vmatpush.msra.mxu0 %v1175
        %v1177 = vand.u32 %v827, 4294901760
        %1178 = vmatpush.msra.mxu0 %v1177
        %v1179 = vand.u32 %v826, 4294901760
        %1180 = vmatmul.f32.gmra.mxu0 %v1179
        %v1181 = vpop.f32.mrf.mxu0
        %v1182 = vadd.f32 %v1145, %v1181
        %1183 = vdwg.mxu0
        %v1184 = vmul.f32 %v1182, 0.0009765625
        %v1185 = vld [vmem:[%s5] sm:$0xff]
        %v1186 = vld [vmem:[%s5 + $0x8] sm:$0xff]
        %v1187 = vld [vmem:[%s5 + $0x10] sm:$0xff]
        %v1188 = vld [vmem:[%s5 + $0x18] sm:$0xff]
        %vm1189 = vcmask 261120
        %v1191 = vsel %vm1189, %v1184, 0
        %1193 = vmatpush.msra.mxu0 0.0
        %1194 = vmatpush.msra.mxu0 0.0
        %1195 = vmatpush.msra.mxu0 0.0
        %1196 = vmatpush.msra.mxu0 0.0
        %1197 = vmatpush.msra.mxu0 0.0
        %1198 = vmatpush.msra.mxu0 0.0
        %1199 = vmatpush.msra.mxu0 0.0
        %1200 = vmatpush.msra.mxu0 0.0
        %1201 = vmatpush.msra.mxu0 0.0
        %1202 = vmatpush.msra.mxu0 0.0
        %1203 = vmatpush.msra.mxu0 0.0
        %1204 = vmatpush.msra.mxu0 0.0
        %v1205 = vand.u32 %v1188, 4294901760
        %1206 = vmatpush.msra.mxu0 %v1205
        %v1207 = vand.u32 %v1187, 4294901760
        %1208 = vmatpush.msra.mxu0 %v1207
        %v1209 = vand.u32 %v1186, 4294901760
        %1210 = vmatpush.msra.mxu0 %v1209
        %v1211 = vand.u32 %v1185, 4294901760
        %1212 = vmatpush.msra.mxu0 %v1211
        %v1213 = vand.u32 %v1191, 4294901760
        %v1214 = vsub.f32 %v1191, %v1213
        %v1215 = vand.u32 %v1214, 4294901760
        %v1216 = vsub.f32 %v1214, %v1215
        %v1217 = vand.u32 %v1216, 4294901760
        %1218 = vmatmul.f32.gmra.mxu0 %v1217
        %v1219 = vpop.f32.mrf.mxu0
        %v1220 = vadd.f32 0.0, %v1219
        %1221 = vdwg.mxu0
        %1222 = vmatpush.msra.mxu0 0.0
        %1223 = vmatpush.msra.mxu0 0.0
        %1224 = vmatpush.msra.mxu0 0.0
        %1225 = vmatpush.msra.mxu0 0.0
        %1226 = vmatpush.msra.mxu0 0.0
        %1227 = vmatpush.msra.mxu0 0.0
        %1228 = vmatpush.msra.mxu0 0.0
        %1229 = vmatpush.msra.mxu0 0.0
        %1230 = vmatpush.msra.mxu0 0.0
        %1231 = vmatpush.msra.mxu0 0.0
        %1232 = vmatpush.msra.mxu0 0.0
        %1233 = vmatpush.msra.mxu0 0.0
        %v1234 = vand.u32 %v1188, 4294901760
        %v1235 = vsub.f32 %v1188, %v1234
        %v1236 = vand.u32 %v1235, 4294901760
        %v1237 = vsub.f32 %v1235, %v1236
        %v1238 = vand.u32 %v1237, 4294901760
        %1239 = vmatpush.msra.mxu0 %v1238
        %v1240 = vand.u32 %v1187, 4294901760
        %v1241 = vsub.f32 %v1187, %v1240
        %v1242 = vand.u32 %v1241, 4294901760
        %v1243 = vsub.f32 %v1241, %v1242
        %v1244 = vand.u32 %v1243, 4294901760
        %1245 = vmatpush.msra.mxu0 %v1244
        %v1246 = vand.u32 %v1186, 4294901760
        %v1247 = vsub.f32 %v1186, %v1246
        %v1248 = vand.u32 %v1247, 4294901760
        %v1249 = vsub.f32 %v1247, %v1248
        %v1250 = vand.u32 %v1249, 4294901760
        %1251 = vmatpush.msra.mxu0 %v1250
        %v1252 = vand.u32 %v1185, 4294901760
        %v1253 = vsub.f32 %v1185, %v1252
        %v1254 = vand.u32 %v1253, 4294901760
        %v1255 = vsub.f32 %v1253, %v1254
        %v1256 = vand.u32 %v1255, 4294901760
        %1257 = vmatpush.msra.mxu0 %v1256
        %v1258 = vand.u32 %v1191, 4294901760
        %1259 = vmatmul.f32.gmra.mxu0 %v1258
        %v1260 = vpop.f32.mrf.mxu0
        %v1261 = vadd.f32 %v1220, %v1260
        %1262 = vdwg.mxu0
        %1263 = vmatpush.msra.mxu0 0.0
        %1264 = vmatpush.msra.mxu0 0.0
        %1265 = vmatpush.msra.mxu0 0.0
        %1266 = vmatpush.msra.mxu0 0.0
        %1267 = vmatpush.msra.mxu0 0.0
        %1268 = vmatpush.msra.mxu0 0.0
        %1269 = vmatpush.msra.mxu0 0.0
        %1270 = vmatpush.msra.mxu0 0.0
        %1271 = vmatpush.msra.mxu0 0.0
        %1272 = vmatpush.msra.mxu0 0.0
        %1273 = vmatpush.msra.mxu0 0.0
        %1274 = vmatpush.msra.mxu0 0.0
        %v1275 = vand.u32 %v1188, 4294901760
        %v1276 = vsub.f32 %v1188, %v1275
        %1277 = vmatpush.msra.mxu0 %v1276
        %v1278 = vand.u32 %v1187, 4294901760
        %v1279 = vsub.f32 %v1187, %v1278
        %1280 = vmatpush.msra.mxu0 %v1279
        %v1281 = vand.u32 %v1186, 4294901760
        %v1282 = vsub.f32 %v1186, %v1281
        %1283 = vmatpush.msra.mxu0 %v1282
        %v1284 = vand.u32 %v1185, 4294901760
        %v1285 = vsub.f32 %v1185, %v1284
        %1286 = vmatpush.msra.mxu0 %v1285
        %v1287 = vand.u32 %v1191, 4294901760
        %v1288 = vsub.f32 %v1191, %v1287
        %1289 = vmatmul.f32.gmra.mxu0 %v1288
        %v1290 = vpop.f32.mrf.mxu0
        %v1291 = vadd.f32 %v1261, %v1290
        %1292 = vdwg.mxu0
        %1293 = vmatpush.msra.mxu0 0.0
        %1294 = vmatpush.msra.mxu0 0.0
        %1295 = vmatpush.msra.mxu0 0.0
        %1296 = vmatpush.msra.mxu0 0.0
        %1297 = vmatpush.msra.mxu0 0.0
        %1298 = vmatpush.msra.mxu0 0.0
        %1299 = vmatpush.msra.mxu0 0.0
        %1300 = vmatpush.msra.mxu0 0.0
        %1301 = vmatpush.msra.mxu0 0.0
        %1302 = vmatpush.msra.mxu0 0.0
        %1303 = vmatpush.msra.mxu0 0.0
        %1304 = vmatpush.msra.mxu0 0.0
        %v1305 = vand.u32 %v1188, 4294901760
        %1306 = vmatpush.msra.mxu0 %v1305
        %v1307 = vand.u32 %v1187, 4294901760
        %1308 = vmatpush.msra.mxu0 %v1307
        %v1309 = vand.u32 %v1186, 4294901760
        %1310 = vmatpush.msra.mxu0 %v1309
        %v1311 = vand.u32 %v1185, 4294901760
        %1312 = vmatpush.msra.mxu0 %v1311
        %v1313 = vand.u32 %v1191, 4294901760
        %v1314 = vsub.f32 %v1191, %v1313
        %v1315 = vand.u32 %v1314, 4294901760
        %1316 = vmatmul.f32.gmra.mxu0 %v1315
        %v1317 = vpop.f32.mrf.mxu0
        %v1318 = vadd.f32 %v1291, %v1317
        %1319 = vdwg.mxu0
        %1320 = vmatpush.msra.mxu0 0.0
        %1321 = vmatpush.msra.mxu0 0.0
        %1322 = vmatpush.msra.mxu0 0.0
        %1323 = vmatpush.msra.mxu0 0.0
        %1324 = vmatpush.msra.mxu0 0.0
        %1325 = vmatpush.msra.mxu0 0.0
        %1326 = vmatpush.msra.mxu0 0.0
        %1327 = vmatpush.msra.mxu0 0.0
        %1328 = vmatpush.msra.mxu0 0.0
        %1329 = vmatpush.msra.mxu0 0.0
        %1330 = vmatpush.msra.mxu0 0.0
        %1331 = vmatpush.msra.mxu0 0.0
        %v1332 = vand.u32 %v1188, 4294901760
        %v1333 = vsub.f32 %v1188, %v1332
        %v1334 = vand.u32 %v1333, 4294901760
        %1335 = vmatpush.msra.mxu0 %v1334
        %v1336 = vand.u32 %v1187, 4294901760
        %v1337 = vsub.f32 %v1187, %v1336
        %v1338 = vand.u32 %v1337, 4294901760
        %1339 = vmatpush.msra.mxu0 %v1338
        %v1340 = vand.u32 %v1186, 4294901760
        %v1341 = vsub.f32 %v1186, %v1340
        %v1342 = vand.u32 %v1341, 4294901760
        %1343 = vmatpush.msra.mxu0 %v1342
        %v1344 = vand.u32 %v1185, 4294901760
        %v1345 = vsub.f32 %v1185, %v1344
        %v1346 = vand.u32 %v1345, 4294901760
        %1347 = vmatpush.msra.mxu0 %v1346
        %v1348 = vand.u32 %v1191, 4294901760
        %1349 = vmatmul.f32.gmra.mxu0 %v1348
        %v1350 = vpop.f32.mrf.mxu0
        %v1351 = vadd.f32 %v1318, %v1350
        %1352 = vdwg.mxu0
        %1353 = vmatpush.msra.mxu0 0.0
        %1354 = vmatpush.msra.mxu0 0.0
        %1355 = vmatpush.msra.mxu0 0.0
        %1356 = vmatpush.msra.mxu0 0.0
        %1357 = vmatpush.msra.mxu0 0.0
        %1358 = vmatpush.msra.mxu0 0.0
        %1359 = vmatpush.msra.mxu0 0.0
        %1360 = vmatpush.msra.mxu0 0.0
        %1361 = vmatpush.msra.mxu0 0.0
        %1362 = vmatpush.msra.mxu0 0.0
        %1363 = vmatpush.msra.mxu0 0.0
        %1364 = vmatpush.msra.mxu0 0.0
        %v1365 = vand.u32 %v1188, 4294901760
        %1366 = vmatpush.msra.mxu0 %v1365
        %v1367 = vand.u32 %v1187, 4294901760
        %1368 = vmatpush.msra.mxu0 %v1367
        %v1369 = vand.u32 %v1186, 4294901760
        %1370 = vmatpush.msra.mxu0 %v1369
        %v1371 = vand.u32 %v1185, 4294901760
        %1372 = vmatpush.msra.mxu0 %v1371
        %v1373 = vand.u32 %v1191, 4294901760
        %1374 = vmatmul.f32.gmra.mxu0 %v1373
        %v1375 = vpop.f32.mrf.mxu0
        %v1376 = vadd.f32 %v1351, %v1375
        %1377 = vdwg.mxu0
        %v1378 = vperm.slane %v1376, 0
        %v1379 = vsub.f32 %v758, %v1378
        %v1380 = vsub.f32 %v759, %v1378
        %v1381 = vsub.f32 %v760, %v1378
        %v1382 = vsub.f32 %v761, %v1378
        %v1383 = vsub.f32 %v762, %v1378
        %v1384 = vsub.f32 %v763, %v1378
        %v1385 = vsub.f32 %v764, %v1378
        %v1386 = vsub.f32 %v765, %v1378
        %v1387 = vsub.f32 %v766, %v1378
        %v1388 = vsub.f32 %v767, %v1378
        %v1389 = vsub.f32 %v768, %v1378
        %v1390 = vsub.f32 %v769, %v1378
        %v1391 = vsub.f32 %v770, %v1378
        %v1392 = vsub.f32 %v771, %v1378
        %v1393 = vsub.f32 %v772, %v1378
        %v1394 = vsub.f32 %v773, %v1378
        %v1395 = vsub.f32 %v774, %v1378
        %v1396 = vsub.f32 %v775, %v1378
        %v1397 = vsub.f32 %v776, %v1378
        %v1398 = vsub.f32 %v777, %v1378
        %v1399 = vsub.f32 %v778, %v1378
        %v1400 = vsub.f32 %v779, %v1378
        %v1401 = vsub.f32 %v780, %v1378
        %v1402 = vsub.f32 %v781, %v1378
        %v1403 = vsub.f32 %v782, %v1378
        %v1404 = vsub.f32 %v783, %v1378
        %v1405 = vsub.f32 %v784, %v1378
        %v1406 = vsub.f32 %v785, %v1378
        %v1407 = vsub.f32 %v786, %v1378
        %v1408 = vsub.f32 %v787, %v1378
        %v1409 = vsub.f32 %v788, %v1378
        %v1410 = vsub.f32 %v789, %v1378
        %v1411 = vmul.f32 %v1379, %v1379
        %v1412 = vmul.f32 %v1380, %v1380
        %v1413 = vmul.f32 %v1381, %v1381
        %v1414 = vmul.f32 %v1382, %v1382
        %v1415 = vmul.f32 %v1383, %v1383
        %v1416 = vmul.f32 %v1384, %v1384
        %v1417 = vmul.f32 %v1385, %v1385
        %v1418 = vmul.f32 %v1386, %v1386
        %v1419 = vmul.f32 %v1387, %v1387
        %v1420 = vmul.f32 %v1388, %v1388
        %v1421 = vmul.f32 %v1389, %v1389
        %v1422 = vmul.f32 %v1390, %v1390
        %v1423 = vmul.f32 %v1391, %v1391
        %v1424 = vmul.f32 %v1392, %v1392
        %v1425 = vmul.f32 %v1393, %v1393
        %v1426 = vmul.f32 %v1394, %v1394
        %v1427 = vmul.f32 %v1395, %v1395
        %v1428 = vmul.f32 %v1396, %v1396
        %v1429 = vmul.f32 %v1397, %v1397
        %v1430 = vmul.f32 %v1398, %v1398
        %v1431 = vmul.f32 %v1399, %v1399
        %v1432 = vmul.f32 %v1400, %v1400
        %v1433 = vmul.f32 %v1401, %v1401
        %v1434 = vmul.f32 %v1402, %v1402
        %v1435 = vmul.f32 %v1403, %v1403
        %v1436 = vmul.f32 %v1404, %v1404
        %v1437 = vmul.f32 %v1405, %v1405
        %v1438 = vmul.f32 %v1406, %v1406
        %v1439 = vmul.f32 %v1407, %v1407
        %v1440 = vmul.f32 %v1408, %v1408
        %v1441 = vmul.f32 %v1409, %v1409
        %v1442 = vmul.f32 %v1410, %v1410
        %v1443 = vadd.f32 %v1411, %v1412
        %v1444 = vadd.f32 %v1443, %v1413
        %v1445 = vadd.f32 %v1444, %v1414
        %v1446 = vadd.f32 %v1445, %v1415
        %v1447 = vadd.f32 %v1446, %v1416
        %v1448 = vadd.f32 %v1447, %v1417
        %v1449 = vadd.f32 %v1448, %v1418
        %v1450 = vadd.f32 %v1449, %v1419
        %v1451 = vadd.f32 %v1450, %v1420
        %v1452 = vadd.f32 %v1451, %v1421
        %v1453 = vadd.f32 %v1452, %v1422
        %v1454 = vadd.f32 %v1453, %v1423
        %v1455 = vadd.f32 %v1454, %v1424
        %v1456 = vadd.f32 %v1455, %v1425
        %v1457 = vadd.f32 %v1456, %v1426
        %v1458 = vadd.f32 %v1457, %v1427
        %v1459 = vadd.f32 %v1458, %v1428
        %v1460 = vadd.f32 %v1459, %v1429
        %v1461 = vadd.f32 %v1460, %v1430
        %v1462 = vadd.f32 %v1461, %v1431
        %v1463 = vadd.f32 %v1462, %v1432
        %v1464 = vadd.f32 %v1463, %v1433
        %v1465 = vadd.f32 %v1464, %v1434
        %v1466 = vadd.f32 %v1465, %v1435
        %v1467 = vadd.f32 %v1466, %v1436
        %v1468 = vadd.f32 %v1467, %v1437
        %v1469 = vadd.f32 %v1468, %v1438
        %v1470 = vadd.f32 %v1469, %v1439
        %v1471 = vadd.f32 %v1470, %v1440
        %v1472 = vadd.f32 %v1471, %v1441
        %v1473 = vadd.f32 %v1472, %v1442
        %v1474 = vrot.slane %v1473, 4
        %v1475 = vadd.f32 %v1473, %v1474
        %v1476 = vrot.slane %v1475, 2
        %v1477 = vadd.f32 %v1475, %v1476
        %v1478 = vrot.slane %v1477, 1
        %v1479 = vadd.f32 %v1477, %v1478
        %v1480 = vand.u32 %v842, 4294901760
        %1481 = vmatpush.msra.mxu0 %v1480
        %v1482 = vand.u32 %v841, 4294901760
        %1483 = vmatpush.msra.mxu0 %v1482
        %v1484 = vand.u32 %v840, 4294901760
        %1485 = vmatpush.msra.mxu0 %v1484
        %v1486 = vand.u32 %v839, 4294901760
        %1487 = vmatpush.msra.mxu0 %v1486
        %v1488 = vand.u32 %v838, 4294901760
        %1489 = vmatpush.msra.mxu0 %v1488
        %v1490 = vand.u32 %v837, 4294901760
        %1491 = vmatpush.msra.mxu0 %v1490
        %v1492 = vand.u32 %v836, 4294901760
        %1493 = vmatpush.msra.mxu0 %v1492
        %v1494 = vand.u32 %v835, 4294901760
        %1495 = vmatpush.msra.mxu0 %v1494
        %v1496 = vand.u32 %v834, 4294901760
        %1497 = vmatpush.msra.mxu0 %v1496
        %v1498 = vand.u32 %v833, 4294901760
        %1499 = vmatpush.msra.mxu0 %v1498
        %v1500 = vand.u32 %v832, 4294901760
        %1501 = vmatpush.msra.mxu0 %v1500
        %v1502 = vand.u32 %v831, 4294901760
        %1503 = vmatpush.msra.mxu0 %v1502
        %v1504 = vand.u32 %v830, 4294901760
        %1505 = vmatpush.msra.mxu0 %v1504
        %v1506 = vand.u32 %v829, 4294901760
        %1507 = vmatpush.msra.mxu0 %v1506
        %v1508 = vand.u32 %v828, 4294901760
        %1509 = vmatpush.msra.mxu0 %v1508
        %v1510 = vand.u32 %v827, 4294901760
        %1511 = vmatpush.msra.mxu0 %v1510
        %v1512 = vand.u32 %v1479, 4294901760
        %v1513 = vsub.f32 %v1479, %v1512
        %v1514 = vand.u32 %v1513, 4294901760
        %v1515 = vsub.f32 %v1513, %v1514
        %v1516 = vand.u32 %v1515, 4294901760
        %1517 = vmatmul.f32.gmra.mxu0 %v1516
        %v1518 = vpop.f32.mrf.mxu0
        %v1519 = vadd.f32 0.0, %v1518
        %1520 = vdwg.mxu0
        %v1521 = vand.u32 %v842, 4294901760
        %v1522 = vsub.f32 %v842, %v1521
        %v1523 = vand.u32 %v1522, 4294901760
        %v1524 = vsub.f32 %v1522, %v1523
        %v1525 = vand.u32 %v1524, 4294901760
        %1526 = vmatpush.msra.mxu0 %v1525
        %v1527 = vand.u32 %v841, 4294901760
        %v1528 = vsub.f32 %v841, %v1527
        %v1529 = vand.u32 %v1528, 4294901760
        %v1530 = vsub.f32 %v1528, %v1529
        %v1531 = vand.u32 %v1530, 4294901760
        %1532 = vmatpush.msra.mxu0 %v1531
        %v1533 = vand.u32 %v840, 4294901760
        %v1534 = vsub.f32 %v840, %v1533
        %v1535 = vand.u32 %v1534, 4294901760
        %v1536 = vsub.f32 %v1534, %v1535
        %v1537 = vand.u32 %v1536, 4294901760
        %1538 = vmatpush.msra.mxu0 %v1537
        %v1539 = vand.u32 %v839, 4294901760
        %v1540 = vsub.f32 %v839, %v1539
        %v1541 = vand.u32 %v1540, 4294901760
        %v1542 = vsub.f32 %v1540, %v1541
        %v1543 = vand.u32 %v1542, 4294901760
        %1544 = vmatpush.msra.mxu0 %v1543
        %v1545 = vand.u32 %v838, 4294901760
        %v1546 = vsub.f32 %v838, %v1545
        %v1547 = vand.u32 %v1546, 4294901760
        %v1548 = vsub.f32 %v1546, %v1547
        %v1549 = vand.u32 %v1548, 4294901760
        %1550 = vmatpush.msra.mxu0 %v1549
        %v1551 = vand.u32 %v837, 4294901760
        %v1552 = vsub.f32 %v837, %v1551
        %v1553 = vand.u32 %v1552, 4294901760
        %v1554 = vsub.f32 %v1552, %v1553
        %v1555 = vand.u32 %v1554, 4294901760
        %1556 = vmatpush.msra.mxu0 %v1555
        %v1557 = vand.u32 %v836, 4294901760
        %v1558 = vsub.f32 %v836, %v1557
        %v1559 = vand.u32 %v1558, 4294901760
        %v1560 = vsub.f32 %v1558, %v1559
        %v1561 = vand.u32 %v1560, 4294901760
        %1562 = vmatpush.msra.mxu0 %v1561
        %v1563 = vand.u32 %v835, 4294901760
        %v1564 = vsub.f32 %v835, %v1563
        %v1565 = vand.u32 %v1564, 4294901760
        %v1566 = vsub.f32 %v1564, %v1565
        %v1567 = vand.u32 %v1566, 4294901760
        %1568 = vmatpush.msra.mxu0 %v1567
        %v1569 = vand.u32 %v834, 4294901760
        %v1570 = vsub.f32 %v834, %v1569
        %v1571 = vand.u32 %v1570, 4294901760
        %v1572 = vsub.f32 %v1570, %v1571
        %v1573 = vand.u32 %v1572, 4294901760
        %1574 = vmatpush.msra.mxu0 %v1573
        %v1575 = vand.u32 %v833, 4294901760
        %v1576 = vsub.f32 %v833, %v1575
        %v1577 = vand.u32 %v1576, 4294901760
        %v1578 = vsub.f32 %v1576, %v1577
        %v1579 = vand.u32 %v1578, 4294901760
        %1580 = vmatpush.msra.mxu0 %v1579
        %v1581 = vand.u32 %v832, 4294901760
        %v1582 = vsub.f32 %v832, %v1581
        %v1583 = vand.u32 %v1582, 4294901760
        %v1584 = vsub.f32 %v1582, %v1583
        %v1585 = vand.u32 %v1584, 4294901760
        %1586 = vmatpush.msra.mxu0 %v1585
        %v1587 = vand.u32 %v831, 4294901760
        %v1588 = vsub.f32 %v831, %v1587
        %v1589 = vand.u32 %v1588, 4294901760
        %v1590 = vsub.f32 %v1588, %v1589
        %v1591 = vand.u32 %v1590, 4294901760
        %1592 = vmatpush.msra.mxu0 %v1591
        %v1593 = vand.u32 %v830, 4294901760
        %v1594 = vsub.f32 %v830, %v1593
        %v1595 = vand.u32 %v1594, 4294901760
        %v1596 = vsub.f32 %v1594, %v1595
        %v1597 = vand.u32 %v1596, 4294901760
        %1598 = vmatpush.msra.mxu0 %v1597
        %v1599 = vand.u32 %v829, 4294901760
        %v1600 = vsub.f32 %v829, %v1599
        %v1601 = vand.u32 %v1600, 4294901760
        %v1602 = vsub.f32 %v1600, %v1601
        %v1603 = vand.u32 %v1602, 4294901760
        %1604 = vmatpush.msra.mxu0 %v1603
        %v1605 = vand.u32 %v828, 4294901760
        %v1606 = vsub.f32 %v828, %v1605
        %v1607 = vand.u32 %v1606, 4294901760
        %v1608 = vsub.f32 %v1606, %v1607
        %v1609 = vand.u32 %v1608, 4294901760
        %1610 = vmatpush.msra.mxu0 %v1609
        %v1611 = vand.u32 %v827, 4294901760
        %v1612 = vsub.f32 %v827, %v1611
        %v1613 = vand.u32 %v1612, 4294901760
        %v1614 = vsub.f32 %v1612, %v1613
        %v1615 = vand.u32 %v1614, 4294901760
        %1616 = vmatpush.msra.mxu0 %v1615
        %v1617 = vand.u32 %v1479, 4294901760
        %1618 = vmatmul.f32.gmra.mxu0 %v1617
        %v1619 = vpop.f32.mrf.mxu0
        %v1620 = vadd.f32 %v1519, %v1619
        %1621 = vdwg.mxu0
        %v1622 = vand.u32 %v842, 4294901760
        %v1623 = vsub.f32 %v842, %v1622
        %1624 = vmatpush.msra.mxu0 %v1623
        %v1625 = vand.u32 %v841, 4294901760
        %v1626 = vsub.f32 %v841, %v1625
        %1627 = vmatpush.msra.mxu0 %v1626
        %v1628 = vand.u32 %v840, 4294901760
        %v1629 = vsub.f32 %v840, %v1628
        %1630 = vmatpush.msra.mxu0 %v1629
        %v1631 = vand.u32 %v839, 4294901760
        %v1632 = vsub.f32 %v839, %v1631
        %1633 = vmatpush.msra.mxu0 %v1632
        %v1634 = vand.u32 %v838, 4294901760
        %v1635 = vsub.f32 %v838, %v1634
        %1636 = vmatpush.msra.mxu0 %v1635
        %v1637 = vand.u32 %v837, 4294901760
        %v1638 = vsub.f32 %v837, %v1637
        %1639 = vmatpush.msra.mxu0 %v1638
        %v1640 = vand.u32 %v836, 4294901760
        %v1641 = vsub.f32 %v836, %v1640
        %1642 = vmatpush.msra.mxu0 %v1641
        %v1643 = vand.u32 %v835, 4294901760
        %v1644 = vsub.f32 %v835, %v1643
        %1645 = vmatpush.msra.mxu0 %v1644
        %v1646 = vand.u32 %v834, 4294901760
        %v1647 = vsub.f32 %v834, %v1646
        %1648 = vmatpush.msra.mxu0 %v1647
        %v1649 = vand.u32 %v833, 4294901760
        %v1650 = vsub.f32 %v833, %v1649
        %1651 = vmatpush.msra.mxu0 %v1650
        %v1652 = vand.u32 %v832, 4294901760
        %v1653 = vsub.f32 %v832, %v1652
        %1654 = vmatpush.msra.mxu0 %v1653
        %v1655 = vand.u32 %v831, 4294901760
        %v1656 = vsub.f32 %v831, %v1655
        %1657 = vmatpush.msra.mxu0 %v1656
        %v1658 = vand.u32 %v830, 4294901760
        %v1659 = vsub.f32 %v830, %v1658
        %1660 = vmatpush.msra.mxu0 %v1659
        %v1661 = vand.u32 %v829, 4294901760
        %v1662 = vsub.f32 %v829, %v1661
        %1663 = vmatpush.msra.mxu0 %v1662
        %v1664 = vand.u32 %v828, 4294901760
        %v1665 = vsub.f32 %v828, %v1664
        %1666 = vmatpush.msra.mxu0 %v1665
        %v1667 = vand.u32 %v827, 4294901760
        %v1668 = vsub.f32 %v827, %v1667
        %1669 = vmatpush.msra.mxu0 %v1668
        %v1670 = vand.u32 %v1479, 4294901760
        %v1671 = vsub.f32 %v1479, %v1670
        %1672 = vmatmul.f32.gmra.mxu0 %v1671
        %v1673 = vpop.f32.mrf.mxu0
        %v1674 = vadd.f32 %v1620, %v1673
        %1675 = vdwg.mxu0
        %v1676 = vand.u32 %v842, 4294901760
        %1677 = vmatpush.msra.mxu0 %v1676
        %v1678 = vand.u32 %v841, 4294901760
        %1679 = vmatpush.msra.mxu0 %v1678
        %v1680 = vand.u32 %v840, 4294901760
        %1681 = vmatpush.msra.mxu0 %v1680
        %v1682 = vand.u32 %v839, 4294901760
        %1683 = vmatpush.msra.mxu0 %v1682
        %v1684 = vand.u32 %v838, 4294901760
        %1685 = vmatpush.msra.mxu0 %v1684
        %v1686 = vand.u32 %v837, 4294901760
        %1687 = vmatpush.msra.mxu0 %v1686
        %v1688 = vand.u32 %v836, 4294901760
        %1689 = vmatpush.msra.mxu0 %v1688
        %v1690 = vand.u32 %v835, 4294901760
        %1691 = vmatpush.msra.mxu0 %v1690
        %v1692 = vand.u32 %v834, 4294901760
        %1693 = vmatpush.msra.mxu0 %v1692
        %v1694 = vand.u32 %v833, 4294901760
        %1695 = vmatpush.msra.mxu0 %v1694
        %v1696 = vand.u32 %v832, 4294901760
        %1697 = vmatpush.msra.mxu0 %v1696
        %v1698 = vand.u32 %v831, 4294901760
        %1699 = vmatpush.msra.mxu0 %v1698
        %v1700 = vand.u32 %v830, 4294901760
        %1701 = vmatpush.msra.mxu0 %v1700
        %v1702 = vand.u32 %v829, 4294901760
        %1703 = vmatpush.msra.mxu0 %v1702
        %v1704 = vand.u32 %v828, 4294901760
        %1705 = vmatpush.msra.mxu0 %v1704
        %v1706 = vand.u32 %v827, 4294901760
        %1707 = vmatpush.msra.mxu0 %v1706
        %v1708 = vand.u32 %v1479, 4294901760
        %v1709 = vsub.f32 %v1479, %v1708
        %v1710 = vand.u32 %v1709, 4294901760
        %1711 = vmatmul.f32.gmra.mxu0 %v1710
        %v1712 = vpop.f32.mrf.mxu0
        %v1713 = vadd.f32 %v1674, %v1712
        %1714 = vdwg.mxu0
        %v1715 = vand.u32 %v842, 4294901760
        %v1716 = vsub.f32 %v842, %v1715
        %v1717 = vand.u32 %v1716, 4294901760
        %1718 = vmatpush.msra.mxu0 %v1717
        %v1719 = vand.u32 %v841, 4294901760
        %v1720 = vsub.f32 %v841, %v1719
        %v1721 = vand.u32 %v1720, 4294901760
        %1722 = vmatpush.msra.mxu0 %v1721
        %v1723 = vand.u32 %v840, 4294901760
        %v1724 = vsub.f32 %v840, %v1723
        %v1725 = vand.u32 %v1724, 4294901760
        %1726 = vmatpush.msra.mxu0 %v1725
        %v1727 = vand.u32 %v839, 4294901760
        %v1728 = vsub.f32 %v839, %v1727
        %v1729 = vand.u32 %v1728, 4294901760
        %1730 = vmatpush.msra.mxu0 %v1729
        %v1731 = vand.u32 %v838, 4294901760
        %v1732 = vsub.f32 %v838, %v1731
        %v1733 = vand.u32 %v1732, 4294901760
        %1734 = vmatpush.msra.mxu0 %v1733
        %v1735 = vand.u32 %v837, 4294901760
        %v1736 = vsub.f32 %v837, %v1735
        %v1737 = vand.u32 %v1736, 4294901760
        %1738 = vmatpush.msra.mxu0 %v1737
        %v1739 = vand.u32 %v836, 4294901760
        %v1740 = vsub.f32 %v836, %v1739
        %v1741 = vand.u32 %v1740, 4294901760
        %1742 = vmatpush.msra.mxu0 %v1741
        %v1743 = vand.u32 %v835, 4294901760
        %v1744 = vsub.f32 %v835, %v1743
        %v1745 = vand.u32 %v1744, 4294901760
        %1746 = vmatpush.msra.mxu0 %v1745
        %v1747 = vand.u32 %v834, 4294901760
        %v1748 = vsub.f32 %v834, %v1747
        %v1749 = vand.u32 %v1748, 4294901760
        %1750 = vmatpush.msra.mxu0 %v1749
        %v1751 = vand.u32 %v833, 4294901760
        %v1752 = vsub.f32 %v833, %v1751
        %v1753 = vand.u32 %v1752, 4294901760
        %1754 = vmatpush.msra.mxu0 %v1753
        %v1755 = vand.u32 %v832, 4294901760
        %v1756 = vsub.f32 %v832, %v1755
        %v1757 = vand.u32 %v1756, 4294901760
        %1758 = vmatpush.msra.mxu0 %v1757
        %v1759 = vand.u32 %v831, 4294901760
        %v1760 = vsub.f32 %v831, %v1759
        %v1761 = vand.u32 %v1760, 4294901760
        %1762 = vmatpush.msra.mxu0 %v1761
        %v1763 = vand.u32 %v830, 4294901760
        %v1764 = vsub.f32 %v830, %v1763
        %v1765 = vand.u32 %v1764, 4294901760
        %1766 = vmatpush.msra.mxu0 %v1765
        %v1767 = vand.u32 %v829, 4294901760
        %v1768 = vsub.f32 %v829, %v1767
        %v1769 = vand.u32 %v1768, 4294901760
        %1770 = vmatpush.msra.mxu0 %v1769
        %v1771 = vand.u32 %v828, 4294901760
        %v1772 = vsub.f32 %v828, %v1771
        %v1773 = vand.u32 %v1772, 4294901760
        %1774 = vmatpush.msra.mxu0 %v1773
        %v1775 = vand.u32 %v827, 4294901760
        %v1776 = vsub.f32 %v827, %v1775
        %v1777 = vand.u32 %v1776, 4294901760
        %1778 = vmatpush.msra.mxu0 %v1777
        %v1779 = vand.u32 %v1479, 4294901760
        %1780 = vmatmul.f32.gmra.mxu0 %v1779
        %v1781 = vpop.f32.mrf.mxu0
        %v1782 = vadd.f32 %v1713, %v1781
        %1783 = vdwg.mxu0
        %v1784 = vand.u32 %v842, 4294901760
        %1785 = vmatpush.msra.mxu0 %v1784
        %v1786 = vand.u32 %v841, 4294901760
        %1787 = vmatpush.msra.mxu0 %v1786
        %v1788 = vand.u32 %v840, 4294901760
        %1789 = vmatpush.msra.mxu0 %v1788
        %v1790 = vand.u32 %v839, 4294901760
        %1791 = vmatpush.msra.mxu0 %v1790
        %v1792 = vand.u32 %v838, 4294901760
        %1793 = vmatpush.msra.mxu0 %v1792
        %v1794 = vand.u32 %v837, 4294901760
        %1795 = vmatpush.msra.mxu0 %v1794
        %v1796 = vand.u32 %v836, 4294901760
        %1797 = vmatpush.msra.mxu0 %v1796
        %v1798 = vand.u32 %v835, 4294901760
        %1799 = vmatpush.msra.mxu0 %v1798
        %v1800 = vand.u32 %v834, 4294901760
        %1801 = vmatpush.msra.mxu0 %v1800
        %v1802 = vand.u32 %v833, 4294901760
        %1803 = vmatpush.msra.mxu0 %v1802
        %v1804 = vand.u32 %v832, 4294901760
        %1805 = vmatpush.msra.mxu0 %v1804
        %v1806 = vand.u32 %v831, 4294901760
        %1807 = vmatpush.msra.mxu0 %v1806
        %v1808 = vand.u32 %v830, 4294901760
        %1809 = vmatpush.msra.mxu0 %v1808
        %v1810 = vand.u32 %v829, 4294901760
        %1811 = vmatpush.msra.mxu0 %v1810
        %v1812 = vand.u32 %v828, 4294901760
        %1813 = vmatpush.msra.mxu0 %v1812
        %v1814 = vand.u32 %v827, 4294901760
        %1815 = vmatpush.msra.mxu0 %v1814
        %v1816 = vand.u32 %v1479, 4294901760
        %1817 = vmatmul.f32.gmra.mxu0 %v1816
        %v1818 = vpop.f32.mrf.mxu0
        %v1819 = vadd.f32 %v1782, %v1818
        %1820 = vdwg.mxu0
        %v1821 = vmul.f32 %v1819, 0.0009765625
        %v1822 = vadd.f32 %v1821, 1e-05
        %v1823 = vrsqrt.pop %v1822
        %v1824 = vmul.f32 %v1823, %v1822
        %v1825 = vmul.f32 %v1824, %v1823
        %v1826 = vmul.f32 0.5, %v1825
        %v1827 = vsub.f32 1.5, %v1826
        %v1828 = vmul.f32 %v1823, %v1827
        %vm1829 = vweird.f32 %v1822
        %vm1830 = vweird.f32 %v1823
        %vm1831 = vmor %vm1829, %vm1830
        %v1832 = vsel %vm1831, %v1823, %v1828
        %v1834 = vsel %vm1189, %v1832, 0
        %1836 = vmatpush.msra.mxu0 0.0
        %1837 = vmatpush.msra.mxu0 0.0
        %1838 = vmatpush.msra.mxu0 0.0
        %1839 = vmatpush.msra.mxu0 0.0
        %1840 = vmatpush.msra.mxu0 0.0
        %1841 = vmatpush.msra.mxu0 0.0
        %1842 = vmatpush.msra.mxu0 0.0
        %1843 = vmatpush.msra.mxu0 0.0
        %1844 = vmatpush.msra.mxu0 0.0
        %1845 = vmatpush.msra.mxu0 0.0
        %1846 = vmatpush.msra.mxu0 0.0
        %1847 = vmatpush.msra.mxu0 0.0
        %v1848 = vand.u32 %v1188, 4294901760
        %1849 = vmatpush.msra.mxu0 %v1848
        %v1850 = vand.u32 %v1187, 4294901760
        %1851 = vmatpush.msra.mxu0 %v1850
        %v1852 = vand.u32 %v1186, 4294901760
        %1853 = vmatpush.msra.mxu0 %v1852
        %v1854 = vand.u32 %v1185, 4294901760
        %1855 = vmatpush.msra.mxu0 %v1854
        %v1856 = vand.u32 %v1834, 4294901760
        %v1857 = vsub.f32 %v1834, %v1856
        %v1858 = vand.u32 %v1857, 4294901760
        %v1859 = vsub.f32 %v1857, %v1858
        %v1860 = vand.u32 %v1859, 4294901760
        %1861 = vmatmul.f32.gmra.mxu0 %v1860
        %v1862 = vpop.f32.mrf.mxu0
        %v1863 = vadd.f32 0.0, %v1862
        %1864 = vdwg.mxu0
        %1865 = vmatpush.msra.mxu0 0.0
        %1866 = vmatpush.msra.mxu0 0.0
        %1867 = vmatpush.msra.mxu0 0.0
        %1868 = vmatpush.msra.mxu0 0.0
        %1869 = vmatpush.msra.mxu0 0.0
        %1870 = vmatpush.msra.mxu0 0.0
        %1871 = vmatpush.msra.mxu0 0.0
        %1872 = vmatpush.msra.mxu0 0.0
        %1873 = vmatpush.msra.mxu0 0.0
        %1874 = vmatpush.msra.mxu0 0.0
        %1875 = vmatpush.msra.mxu0 0.0
        %1876 = vmatpush.msra.mxu0 0.0
        %v1877 = vand.u32 %v1188, 4294901760
        %v1878 = vsub.f32 %v1188, %v1877
        %v1879 = vand.u32 %v1878, 4294901760
        %v1880 = vsub.f32 %v1878, %v1879
        %v1881 = vand.u32 %v1880, 4294901760
        %1882 = vmatpush.msra.mxu0 %v1881
        %v1883 = vand.u32 %v1187, 4294901760
        %v1884 = vsub.f32 %v1187, %v1883
        %v1885 = vand.u32 %v1884, 4294901760
        %v1886 = vsub.f32 %v1884, %v1885
        %v1887 = vand.u32 %v1886, 4294901760
        %1888 = vmatpush.msra.mxu0 %v1887
        %v1889 = vand.u32 %v1186, 4294901760
        %v1890 = vsub.f32 %v1186, %v1889
        %v1891 = vand.u32 %v1890, 4294901760
        %v1892 = vsub.f32 %v1890, %v1891
        %v1893 = vand.u32 %v1892, 4294901760
        %1894 = vmatpush.msra.mxu0 %v1893
        %v1895 = vand.u32 %v1185, 4294901760
        %v1896 = vsub.f32 %v1185, %v1895
        %v1897 = vand.u32 %v1896, 4294901760
        %v1898 = vsub.f32 %v1896, %v1897
        %v1899 = vand.u32 %v1898, 4294901760
        %1900 = vmatpush.msra.mxu0 %v1899
        %v1901 = vand.u32 %v1834, 4294901760
        %1902 = vmatmul.f32.gmra.mxu0 %v1901
        %v1903 = vpop.f32.mrf.mxu0
        %v1904 = vadd.f32 %v1863, %v1903
        %1905 = vdwg.mxu0
        %1906 = vmatpush.msra.mxu0 0.0
        %1907 = vmatpush.msra.mxu0 0.0
        %1908 = vmatpush.msra.mxu0 0.0
        %1909 = vmatpush.msra.mxu0 0.0
        %1910 = vmatpush.msra.mxu0 0.0
        %1911 = vmatpush.msra.mxu0 0.0
        %1912 = vmatpush.msra.mxu0 0.0
        %1913 = vmatpush.msra.mxu0 0.0
        %1914 = vmatpush.msra.mxu0 0.0
        %1915 = vmatpush.msra.mxu0 0.0
        %1916 = vmatpush.msra.mxu0 0.0
        %1917 = vmatpush.msra.mxu0 0.0
        %v1918 = vand.u32 %v1188, 4294901760
        %v1919 = vsub.f32 %v1188, %v1918
        %1920 = vmatpush.msra.mxu0 %v1919
        %v1921 = vand.u32 %v1187, 4294901760
        %v1922 = vsub.f32 %v1187, %v1921
        %1923 = vmatpush.msra.mxu0 %v1922
        %v1924 = vand.u32 %v1186, 4294901760
        %v1925 = vsub.f32 %v1186, %v1924
        %1926 = vmatpush.msra.mxu0 %v1925
        %v1927 = vand.u32 %v1185, 4294901760
        %v1928 = vsub.f32 %v1185, %v1927
        %1929 = vmatpush.msra.mxu0 %v1928
        %v1930 = vand.u32 %v1834, 4294901760
        %v1931 = vsub.f32 %v1834, %v1930
        %1932 = vmatmul.f32.gmra.mxu0 %v1931
        %v1933 = vpop.f32.mrf.mxu0
        %v1934 = vadd.f32 %v1904, %v1933
        %1935 = vdwg.mxu0
        %1936 = vmatpush.msra.mxu0 0.0
        %1937 = vmatpush.msra.mxu0 0.0
        %1938 = vmatpush.msra.mxu0 0.0
        %1939 = vmatpush.msra.mxu0 0.0
        %1940 = vmatpush.msra.mxu0 0.0
        %1941 = vmatpush.msra.mxu0 0.0
        %1942 = vmatpush.msra.mxu0 0.0
        %1943 = vmatpush.msra.mxu0 0.0
        %1944 = vmatpush.msra.mxu0 0.0
        %1945 = vmatpush.msra.mxu0 0.0
        %1946 = vmatpush.msra.mxu0 0.0
        %1947 = vmatpush.msra.mxu0 0.0
        %v1948 = vand.u32 %v1188, 4294901760
        %1949 = vmatpush.msra.mxu0 %v1948
        %v1950 = vand.u32 %v1187, 4294901760
        %1951 = vmatpush.msra.mxu0 %v1950
        %v1952 = vand.u32 %v1186, 4294901760
        %1953 = vmatpush.msra.mxu0 %v1952
        %v1954 = vand.u32 %v1185, 4294901760
        %1955 = vmatpush.msra.mxu0 %v1954
        %v1956 = vand.u32 %v1834, 4294901760
        %v1957 = vsub.f32 %v1834, %v1956
        %v1958 = vand.u32 %v1957, 4294901760
        %1959 = vmatmul.f32.gmra.mxu0 %v1958
        %v1960 = vpop.f32.mrf.mxu0
        %v1961 = vadd.f32 %v1934, %v1960
        %1962 = vdwg.mxu0
        %1963 = vmatpush.msra.mxu0 0.0
        %1964 = vmatpush.msra.mxu0 0.0
        %1965 = vmatpush.msra.mxu0 0.0
        %1966 = vmatpush.msra.mxu0 0.0
        %1967 = vmatpush.msra.mxu0 0.0
        %1968 = vmatpush.msra.mxu0 0.0
        %1969 = vmatpush.msra.mxu0 0.0
        %1970 = vmatpush.msra.mxu0 0.0
        %1971 = vmatpush.msra.mxu0 0.0
        %1972 = vmatpush.msra.mxu0 0.0
        %1973 = vmatpush.msra.mxu0 0.0
        %1974 = vmatpush.msra.mxu0 0.0
        %v1975 = vand.u32 %v1188, 4294901760
        %v1976 = vsub.f32 %v1188, %v1975
        %v1977 = vand.u32 %v1976, 4294901760
        %1978 = vmatpush.msra.mxu0 %v1977
        %v1979 = vand.u32 %v1187, 4294901760
        %v1980 = vsub.f32 %v1187, %v1979
        %v1981 = vand.u32 %v1980, 4294901760
        %1982 = vmatpush.msra.mxu0 %v1981
        %v1983 = vand.u32 %v1186, 4294901760
        %v1984 = vsub.f32 %v1186, %v1983
        %v1985 = vand.u32 %v1984, 4294901760
        %1986 = vmatpush.msra.mxu0 %v1985
        %v1987 = vand.u32 %v1185, 4294901760
        %v1988 = vsub.f32 %v1185, %v1987
        %v1989 = vand.u32 %v1988, 4294901760
        %1990 = vmatpush.msra.mxu0 %v1989
        %v1991 = vand.u32 %v1834, 4294901760
        %1992 = vmatmul.f32.gmra.mxu0 %v1991
        %v1993 = vpop.f32.mrf.mxu0
        %v1994 = vadd.f32 %v1961, %v1993
        %1995 = vdwg.mxu0
        %1996 = vmatpush.msra.mxu0 0.0
        %1997 = vmatpush.msra.mxu0 0.0
        %1998 = vmatpush.msra.mxu0 0.0
        %1999 = vmatpush.msra.mxu0 0.0
        %2000 = vmatpush.msra.mxu0 0.0
        %2001 = vmatpush.msra.mxu0 0.0
        %2002 = vmatpush.msra.mxu0 0.0
        %2003 = vmatpush.msra.mxu0 0.0
        %2004 = vmatpush.msra.mxu0 0.0
        %2005 = vmatpush.msra.mxu0 0.0
        %2006 = vmatpush.msra.mxu0 0.0
        %2007 = vmatpush.msra.mxu0 0.0
        %v2008 = vand.u32 %v1188, 4294901760
        %2009 = vmatpush.msra.mxu0 %v2008
        %v2010 = vand.u32 %v1187, 4294901760
        %2011 = vmatpush.msra.mxu0 %v2010
        %v2012 = vand.u32 %v1186, 4294901760
        %2013 = vmatpush.msra.mxu0 %v2012
        %v2014 = vand.u32 %v1185, 4294901760
        %2015 = vmatpush.msra.mxu0 %v2014
        %v2016 = vand.u32 %v1834, 4294901760
        %2017 = vmatmul.f32.gmra.mxu0 %v2016
        %v2018 = vpop.f32.mrf.mxu0
        %v2019 = vadd.f32 %v1994, %v2018
        %2020 = vdwg.mxu0
        %v2021 = vld [vmem:[%s2] sm:$0x1]
        %v2022 = vmul.f32 %v2019, %v2021
        %v2023 = vld [vmem:[%s3] sm:$0x1]
        %v2024 = vmul.f32 %v1376, %v2022
        %v2025 = vsub.f32 %v2023, %v2024
        %v2026 = vperm.slane %v2022, 0
        %v2027 = vmul.f32 %v758, %v2026
        %v2028 = vmul.f32 %v759, %v2026
        %v2029 = vmul.f32 %v760, %v2026
        %v2030 = vmul.f32 %v761, %v2026
        %v2031 = vmul.f32 %v762, %v2026
        %v2032 = vmul.f32 %v763, %v2026
        %v2033 = vmul.f32 %v764, %v2026
        %v2034 = vmul.f32 %v765, %v2026
        %v2035 = vmul.f32 %v766, %v2026
        %v2036 = vmul.f32 %v767, %v2026
        %v2037 = vmul.f32 %v768, %v2026
        %v2038 = vmul.f32 %v769, %v2026
        %v2039 = vmul.f32 %v770, %v2026
        %v2040 = vmul.f32 %v771, %v2026
        %v2041 = vmul.f32 %v772, %v2026
        %v2042 = vmul.f32 %v773, %v2026
        %v2043 = vmul.f32 %v774, %v2026
        %v2044 = vmul.f32 %v775, %v2026
        %v2045 = vmul.f32 %v776, %v2026
        %v2046 = vmul.f32 %v777, %v2026
        %v2047 = vmul.f32 %v778, %v2026
        %v2048 = vmul.f32 %v779, %v2026
        %v2049 = vmul.f32 %v780, %v2026
        %v2050 = vmul.f32 %v781, %v2026
        %v2051 = vmul.f32 %v782, %v2026
        %v2052 = vmul.f32 %v783, %v2026
        %v2053 = vmul.f32 %v784, %v2026
        %v2054 = vmul.f32 %v785, %v2026
        %v2055 = vmul.f32 %v786, %v2026
        %v2056 = vmul.f32 %v787, %v2026
        %v2057 = vmul.f32 %v788, %v2026
        %v2058 = vmul.f32 %v789, %v2026
        %v2060 = vperm.slane %v2025, 0
        %v2062 = vadd.f32 %v2027, %v2060
        %v2063 = vadd.f32 %v2028, %v2060
        %v2064 = vadd.f32 %v2029, %v2060
        %v2065 = vadd.f32 %v2030, %v2060
        %v2066 = vadd.f32 %v2031, %v2060
        %v2067 = vadd.f32 %v2032, %v2060
        %v2068 = vadd.f32 %v2033, %v2060
        %v2069 = vadd.f32 %v2034, %v2060
        %v2070 = vadd.f32 %v2035, %v2060
        %v2071 = vadd.f32 %v2036, %v2060
        %v2072 = vadd.f32 %v2037, %v2060
        %v2073 = vadd.f32 %v2038, %v2060
        %v2074 = vadd.f32 %v2039, %v2060
        %v2075 = vadd.f32 %v2040, %v2060
        %v2076 = vadd.f32 %v2041, %v2060
        %v2077 = vadd.f32 %v2042, %v2060
        %v2078 = vadd.f32 %v2043, %v2060
        %v2079 = vadd.f32 %v2044, %v2060
        %v2080 = vadd.f32 %v2045, %v2060
        %v2081 = vadd.f32 %v2046, %v2060
        %v2082 = vadd.f32 %v2047, %v2060
        %v2083 = vadd.f32 %v2048, %v2060
        %v2084 = vadd.f32 %v2049, %v2060
        %v2085 = vadd.f32 %v2050, %v2060
        %v2086 = vadd.f32 %v2051, %v2060
        %v2087 = vadd.f32 %v2052, %v2060
        %v2088 = vadd.f32 %v2053, %v2060
        %v2089 = vadd.f32 %v2054, %v2060
        %v2090 = vadd.f32 %v2055, %v2060
        %v2091 = vadd.f32 %v2056, %v2060
        %v2092 = vadd.f32 %v2057, %v2060
        %v2093 = vadd.f32 %v2058, %v2060
        %v2094 = vmax.f32 %v2062, 0.0
        %v2095 = vmax.f32 %v2063, 0.0
        %v2096 = vmax.f32 %v2064, 0.0
        %v2097 = vmax.f32 %v2065, 0.0
        %v2098 = vmax.f32 %v2066, 0.0
        %v2099 = vmax.f32 %v2067, 0.0
        %v2100 = vmax.f32 %v2068, 0.0
        %v2101 = vmax.f32 %v2069, 0.0
        %v2102 = vmax.f32 %v2070, 0.0
        %v2103 = vmax.f32 %v2071, 0.0
        %v2104 = vmax.f32 %v2072, 0.0
        %v2105 = vmax.f32 %v2073, 0.0
        %v2106 = vmax.f32 %v2074, 0.0
        %v2107 = vmax.f32 %v2075, 0.0
        %v2108 = vmax.f32 %v2076, 0.0
        %v2109 = vmax.f32 %v2077, 0.0
        %v2110 = vmax.f32 %v2078, 0.0
        %v2111 = vmax.f32 %v2079, 0.0
        %v2112 = vmax.f32 %v2080, 0.0
        %v2113 = vmax.f32 %v2081, 0.0
        %v2114 = vmax.f32 %v2082, 0.0
        %v2115 = vmax.f32 %v2083, 0.0
        %v2116 = vmax.f32 %v2084, 0.0
        %v2117 = vmax.f32 %v2085, 0.0
        %v2118 = vmax.f32 %v2086, 0.0
        %v2119 = vmax.f32 %v2087, 0.0
        %v2120 = vmax.f32 %v2088, 0.0
        %v2121 = vmax.f32 %v2089, 0.0
        %v2122 = vmax.f32 %v2090, 0.0
        %v2123 = vmax.f32 %v2091, 0.0
        %v2124 = vmax.f32 %v2092, 0.0
        %v2125 = vmax.f32 %v2093, 0.0
        %v2126 = vpack.c.bf16 %v2094, %v2094
        %v2127 = vpack.c.bf16 %v2095, %v2095
        %v2128 = vpack.c.bf16 %v2096, %v2096
        %v2129 = vpack.c.bf16 %v2097, %v2097
        %v2130 = vpack.c.bf16 %v2098, %v2098
        %v2131 = vpack.c.bf16 %v2099, %v2099
        %v2132 = vpack.c.bf16 %v2100, %v2100
        %v2133 = vpack.c.bf16 %v2101, %v2101
        %v2134 = vpack.c.bf16 %v2102, %v2102
        %v2135 = vpack.c.bf16 %v2103, %v2103
        %v2136 = vpack.c.bf16 %v2104, %v2104
        %v2137 = vpack.c.bf16 %v2105, %v2105
        %v2138 = vpack.c.bf16 %v2106, %v2106
        %v2139 = vpack.c.bf16 %v2107, %v2107
        %v2140 = vpack.c.bf16 %v2108, %v2108
        %v2141 = vpack.c.bf16 %v2109, %v2109
        %v2142 = vpack.c.bf16 %v2110, %v2110
        %v2143 = vpack.c.bf16 %v2111, %v2111
        %v2144 = vpack.c.bf16 %v2112, %v2112
        %v2145 = vpack.c.bf16 %v2113, %v2113
        %v2146 = vpack.c.bf16 %v2114, %v2114
        %v2147 = vpack.c.bf16 %v2115, %v2115
        %v2148 = vpack.c.bf16 %v2116, %v2116
        %v2149 = vpack.c.bf16 %v2117, %v2117
        %v2150 = vpack.c.bf16 %v2118, %v2118
        %v2151 = vpack.c.bf16 %v2119, %v2119
        %v2152 = vpack.c.bf16 %v2120, %v2120
        %v2153 = vpack.c.bf16 %v2121, %v2121
        %v2154 = vpack.c.bf16 %v2122, %v2122
        %v2155 = vpack.c.bf16 %v2123, %v2123
        %v2156 = vpack.c.bf16 %v2124, %v2124
        %v2157 = vpack.c.bf16 %v2125, %v2125
        %2158 = vst [vmem:[%s244] sm:$0xf] %v2126
        %2159 = vst [vmem:[%s244 + $0x4] sm:$0xf] %v2127
        %2160 = vst [vmem:[%s244 + $0x8] sm:$0xf] %v2128
        %2161 = vst [vmem:[%s244 + $0xc] sm:$0xf] %v2129
        %2162 = vst [vmem:[%s244 + $0x10] sm:$0xf] %v2130
        %2163 = vst [vmem:[%s244 + $0x14] sm:$0xf] %v2131
        %2164 = vst [vmem:[%s244 + $0x18] sm:$0xf] %v2132
        %2165 = vst [vmem:[%s244 + $0x1c] sm:$0xf] %v2133
        %2166 = vst [vmem:[%s244 + $0x20] sm:$0xf] %v2134
        %2167 = vst [vmem:[%s244 + $0x24] sm:$0xf] %v2135
        %2168 = vst [vmem:[%s244 + $0x28] sm:$0xf] %v2136
        %2169 = vst [vmem:[%s244 + $0x2c] sm:$0xf] %v2137
        %2170 = vst [vmem:[%s244 + $0x30] sm:$0xf] %v2138
        %2171 = vst [vmem:[%s244 + $0x34] sm:$0xf] %v2139
        %2172 = vst [vmem:[%s244 + $0x38] sm:$0xf] %v2140
        %2173 = vst [vmem:[%s244 + $0x3c] sm:$0xf] %v2141
        %2174 = vst [vmem:[%s244 + $0x40] sm:$0xf] %v2142
        %2175 = vst [vmem:[%s244 + $0x44] sm:$0xf] %v2143
        %2176 = vst [vmem:[%s244 + $0x48] sm:$0xf] %v2144
        %2177 = vst [vmem:[%s244 + $0x4c] sm:$0xf] %v2145
        %2178 = vst [vmem:[%s244 + $0x50] sm:$0xf] %v2146
        %2179 = vst [vmem:[%s244 + $0x54] sm:$0xf] %v2147
        %2180 = vst [vmem:[%s244 + $0x58] sm:$0xf] %v2148
        %2181 = vst [vmem:[%s244 + $0x5c] sm:$0xf] %v2149
        %2182 = vst [vmem:[%s244 + $0x60] sm:$0xf] %v2150
        %2183 = vst [vmem:[%s244 + $0x64] sm:$0xf] %v2151
        %2184 = vst [vmem:[%s244 + $0x68] sm:$0xf] %v2152
        %2185 = vst [vmem:[%s244 + $0x6c] sm:$0xf] %v2153
        %2186 = vst [vmem:[%s244 + $0x70] sm:$0xf] %v2154
        %2187 = vst [vmem:[%s244 + $0x74] sm:$0xf] %v2155
        %2188 = vst [vmem:[%s244 + $0x78] sm:$0xf] %v2156
        %2189 = vst [vmem:[%s244 + $0x7c] sm:$0xf] %v2157
        %s2190 = sand.u32 %s159, 1
        %s2191 = scalar_lea.sflag [#allocation4], %s2190
        %s2192 = sand.u32 %s159, 1
        %s2193 = smul.addr %s2192, 128
        %s2194 = scalar_lea.vmem [#allocation3], %s2193
        // Predicated region
        $region45: #{tpu_custom_call.1} parent=43 // pred_check
          %p2195 = pneg %p169
        $region46: #{tpu_custom_call.1} parent=43 // pred_check_branch
          %2197 = sbr.rel (%p2195) target = $region48
        $region47: #{tpu_custom_call.1} parent=43 // pred_region
          %2199 = vsyncadd %s2191, 0
          %s2200 = smul.addr %s20, 32
          %s2201 = smul.addr %s2200, 4
          %s2202 = scalar_lea.hbm %s6, %s2201
          %s2203 = sshll.u32 %s2194, 4
          %s2204 = int_to_ptr.vmem [resolvable:$true] %s2203
          %s2205 = sshll.u32 %s2202, 4
          %s2206 = int_to_ptr.hbm [resolvable:$true] %s2205
          %2211 = dma.vmem_to_hbm [thread:$0]  %s2204, 2048, %s2206, %s2191, 64, 64, 4
        $region48: #{tpu_custom_call.1} parent=43 // pred_fallthru
          _
      $region44: #{tpu_custom_call.1} parent=5 // pred_fallthru
        _
      %p2212 = scmp.le.s32.totalorder 2, %s15
      // Predicated region
      $region49: #{tpu_custom_call.1} parent=5 // pred_check
        %p2213 = pneg %p2212
      $region50: #{tpu_custom_call.1} parent=5 // pred_check_branch
        %2215 = sbr.rel (%p2213) target = $region52
      $region51: #{tpu_custom_call.1} parent=5 // pred_region
        %s2216 = ssub.s32 %s15, 2
        // Predicated region
        $region53: #{tpu_custom_call.1} parent=51 // pred_check
          %p2217 = pneg %p175
        $region54: #{tpu_custom_call.1} parent=51 // pred_check_branch
          %2219 = sbr.rel (%p2217) target = $region56
        $region55: #{tpu_custom_call.1} parent=51 // pred_region
          %s2220 = sand.u32 %s160, 1
          %s2221 = scalar_lea.sflag [#allocation4], %s2220
          %s2222 = sand.u32 %s160, 1
          %s2223 = smul.addr %s2222, 128
          %s2224 = scalar_lea.vmem [#allocation3], %s2223
          %2226 = dma.done %s2221, 2048
        $region56: #{tpu_custom_call.1} parent=51 // pred_fallthru
          _
      $region52: #{tpu_custom_call.1} parent=5 // pred_fallthru
        _
    $region6: #{tpu_custom_call.1} parent=1 // loop_footer
      %s19 = sadd.s32 1, %s15
    $region7: #{tpu_custom_call.1} parent=1 // loop_footer_branch
      %14 = sbr.rel target = $region3
    $region8: #{tpu_custom_call.1} parent=1 // loop_exit
      _
    %2227 = vsyncpa [#allocation4], 1
    %s2228 = scalar_lea.sflag [#allocation4], 1
    %2229 = vsyncpa %s2228, 1

</llo_original>
